<compile_context>
chip_gen: v7x
topology: tpu7x:2x2x1
jax: 0.10.0
libtpu: 0.0.40
codegen_flags: <defaults>
</compile_context>

<pallas_src>
import math
from functools import partial

import jax
import jax.numpy as jnp
from jax.experimental import pallas as pl
from jax.experimental.pallas import tpu as pltpu


def mha_kernel(q_ref, k_ref,
               wq_ref, bq_ref, wk_ref, bk_ref, wv_ref, bv_ref, wo_ref, bo_ref,
               pad_bias_ref, dep_ref, o_ref, *, n_heads):
    # q_ref: (1, tq, D), k_ref: (1, Sk, D), weights: (D, D), biases: (1, D)
    # pad_bias_ref: (1, 1, Sk) additive f32 (-1e30 == pad), dep_ref: (tq, Sk)
    # o_ref: (1, tq, D)
    xq = q_ref[0]                              # (tq, D), native dtype (no f32 upcast)
    xk = k_ref[0]                              # (Sk, D)
    act_dtype = xq.dtype
    tq, D = xq.shape
    E = D // n_heads
    inv_scale = 1.0 / math.sqrt(D)             # PyTorch module scales by sqrt(d_model)

    # Projections: MXU in native dtype, f32 accumulate, cast back for score matmuls.
    q = (jnp.dot(xq, wq_ref[...], preferred_element_type=jnp.float32)
         + bq_ref[...]).astype(act_dtype)
    k = (jnp.dot(xk, wk_ref[...], preferred_element_type=jnp.float32)
         + bk_ref[...]).astype(act_dtype)
    v = (jnp.dot(xk, wv_ref[...], preferred_element_type=jnp.float32)
         + bv_ref[...]).astype(act_dtype)

    # Single fused additive mask bias, computed once (not per head).
    bias = dep_ref[...] + pad_bias_ref[0]      # (tq, Sk) + (1, Sk) -> (tq, Sk), f32

    wo = wo_ref[...]                           # (D, D)
    acc = jnp.zeros((tq, D), jnp.float32)      # f32 output-projection accumulator

    for h in range(n_heads):                   # static, small head count
        qh = q[:, h * E:(h + 1) * E]           # (tq, E)
        kh = k[:, h * E:(h + 1) * E]           # (Sk, E)
        vh = v[:, h * E:(h + 1) * E]           # (Sk, E)
        s = jnp.dot(qh, kh.T, preferred_element_type=jnp.float32) * inv_scale + bias
        m = jnp.max(s, axis=-1, keepdims=True)
        e = jnp.exp(s - m)
        denom = jnp.sum(e, axis=-1, keepdims=True)
        p = (e * pl.reciprocal(denom, approx=True)).astype(act_dtype)   # softmax rows
        head_out = jnp.dot(p, vh, preferred_element_type=jnp.float32)   # (tq, E)
        # Per-head output projection: accumulate head_out @ Wo[hE:(h+1)E, :]
        # instead of concatenating heads along the lane axis.
        acc = acc + jnp.dot(head_out.astype(act_dtype), wo[h * E:(h + 1) * E, :],
                            preferred_element_type=jnp.float32)

    out = acc + bo_ref[...]
    o_ref[0] = out.astype(o_ref.dtype)


def _pick_query_tile(sq, max_tile=256):
    """Largest query tile <= max_tile that divides Sq and keeps (8,128) tiling legal."""
    if sq <= max_tile:
        return sq
    for t in range(max_tile, 7, -8):           # multiples of 8 only
        if sq % t == 0:
            return t
    return sq                                  # fall back to full extent


def self_attention_mh(query_features, key_features, params, key_padding_mask,
                      dependency_mask=None, *, n_heads, q_tile=None):
    B, Sq, D = query_features.shape
    Sk = key_features.shape[1]
    if dependency_mask is None:
        dependency_mask = jnp.zeros((Sq, Sk), jnp.float32)
    # Pre-bake padding mask into an additive bias (no per-element compare in kernel).
    pad_bias = key_padding_mask.astype(jnp.float32).reshape(B, 1, Sk) * (-1e30)

    tq = _pick_query_tile(Sq) if q_tile is None else q_tile
    assert Sq % tq == 0, "query tile must divide Sq"

    wspec = pl.BlockSpec((D, D), lambda b, qi: (0, 0))
    bspec = pl.BlockSpec((1, D), lambda b, qi: (0, 0))

    return pl.pallas_call(
        partial(mha_kernel, n_heads=n_heads),
        out_shape=jax.ShapeDtypeStruct((B, Sq, D), query_features.dtype),
        grid=(B, Sq // tq),
        in_specs=[
            pl.BlockSpec((1, tq, D), lambda b, qi: (b, qi, 0)),   # query_features
            pl.BlockSpec((1, Sk, D), lambda b, qi: (b, 0, 0)),    # key_features
            wspec, bspec,                                         # Wq, bq
            wspec, bspec,                                         # Wk, bk
            wspec, bspec,                                         # Wv, bv
            wspec, bspec,                                         # Wo, bo
            pl.BlockSpec((1, 1, Sk), lambda b, qi: (b, 0, 0)),    # additive pad bias
            pl.BlockSpec((tq, Sk), lambda b, qi: (qi, 0)),        # dependency_mask
        ],
        out_specs=pl.BlockSpec((1, tq, D), lambda b, qi: (b, qi, 0)),
        compiler_params=pltpu.CompilerParams(
            dimension_semantics=("parallel", "parallel")),
    )(query_features, key_features,
      params["wq"], params["bq"], params["wk"], params["bk"],
      params["wv"], params["bv"], params["wo"], params["bo"],
      pad_bias, dependency_mask)


def reference_jax(query_features, key_features, params, key_padding_mask,
                  dependency_mask, n_heads):
    """Pure-JAX replica of the PyTorch forward, for correctness checking."""
    B, Sq, D = query_features.shape
    Sk = key_features.shape[1]
    E = D // n_heads
    q = query_features @ params["wq"] + params["bq"][0]
    k = key_features @ params["wk"] + params["bk"][0]
    v = key_features @ params["wv"] + params["bv"][0]
    qh = q.reshape(B, Sq, n_heads, E)
    kh = k.reshape(B, Sk, n_heads, E)
    vh = v.reshape(B, Sk, n_heads, E)
    s = jnp.einsum('bqhe,bkhe->bhqk', qh, kh) / math.sqrt(D)
    s = jnp.where(key_padding_mask[:, None, None, :], -jnp.inf, s)
    s = s + dependency_mask[None, None]
    p = jax.nn.softmax(s, axis=-1)
    agg = jnp.einsum('bhqk,bkhe->bqhe', p, vh).reshape(B, Sq, D)
    return agg @ params["wo"] + params["bo"][0]


if __name__ == "__main__":
    B, S, D, H = 2, 8, 32, 4

    key = jax.random.PRNGKey(0)
    ks = jax.random.split(key, 11)
    scale = 1.0 / math.sqrt(D)
    params = {
        "wq": jax.random.normal(ks[0], (D, D), jnp.float32) * scale,
        "bq": jax.random.normal(ks[1], (1, D), jnp.float32) * 0.01,
        "wk": jax.random.normal(ks[2], (D, D), jnp.float32) * scale,
        "bk": jax.random.normal(ks[3], (1, D), jnp.float32) * 0.01,
        "wv": jax.random.normal(ks[4], (D, D), jnp.float32) * scale,
        "bv": jax.random.normal(ks[5], (1, D), jnp.float32) * 0.01,
        "wo": jax.random.normal(ks[6], (D, D), jnp.float32) * scale,
        "bo": jax.random.normal(ks[7], (1, D), jnp.float32) * 0.01,
    }

    query_features = jax.random.normal(ks[8], (B, S, D), jnp.float32)
    key_features = jax.random.normal(ks[9], (B, S, D), jnp.float32)

    # Pad the last two key positions of batch element 1 (True == padded).
    key_padding_mask = jnp.zeros((B, S), bool).at[1, -2:].set(True)
    dependency_mask = jnp.zeros((S, S), jnp.float32)  # module default (no dep mask)

    out = self_attention_mh(query_features, key_features, params,
                            key_padding_mask, dependency_mask, n_heads=H)
    out = jax.block_until_ready(out)

    ref = reference_jax(query_features, key_features, params,
                        key_padding_mask, dependency_mask, H)
    assert out.shape == (B, S, D)
    # Tolerance accounts for the EUP approx-reciprocal in the softmax denominator.
    assert jnp.allclose(out, ref, atol=1e-2, rtol=1e-2), "mismatch vs JAX reference"

    print("KERNEL_OK")
</pallas_src>

<mosaic_0001>
module attributes {stable_mosaic.version = 11 : i64} {
  func.func @mha_kernel(%arg0: i32, %arg1: i32, %arg2: memref<1x8x32xf32, #tpu.memory_space<vmem>>, %arg3: memref<1x8x32xf32, #tpu.memory_space<vmem>>, %arg4: memref<32x32xf32, #tpu.memory_space<vmem>>, %arg5: memref<1x32xf32, #tpu.memory_space<vmem>>, %arg6: memref<32x32xf32, #tpu.memory_space<vmem>>, %arg7: memref<1x32xf32, #tpu.memory_space<vmem>>, %arg8: memref<32x32xf32, #tpu.memory_space<vmem>>, %arg9: memref<1x32xf32, #tpu.memory_space<vmem>>, %arg10: memref<32x32xf32, #tpu.memory_space<vmem>>, %arg11: memref<1x32xf32, #tpu.memory_space<vmem>>, %arg12: memref<1x1x8xf32, #tpu.memory_space<vmem>>, %arg13: memref<8x8xf32, #tpu.memory_space<vmem>>, %arg14: memref<1x8x32xf32, #tpu.memory_space<vmem>>) attributes {dimension_semantics = [#tpu.dimension_semantics<parallel>, #tpu.dimension_semantics<parallel>], iteration_bounds = array<i64: 2, 1>, scalar_prefetch = 0 : i64, scratch_operands = 0 : i64, tpu.core_type = #tpu.core_type<tc>, window_params = [{transform_indices = @transform_0, window_bounds = array<i64: 1, 8, 32>}, {transform_indices = @transform_1, window_bounds = array<i64: 1, 8, 32>}, {pipeline_mode = #tpu.pipeline_mode<synchronous>, transform_indices = @transform_2, window_bounds = array<i64: 32, 32>}, {pipeline_mode = #tpu.pipeline_mode<synchronous>, transform_indices = @transform_3, window_bounds = array<i64: 1, 32>}, {pipeline_mode = #tpu.pipeline_mode<synchronous>, transform_indices = @transform_4, window_bounds = array<i64: 32, 32>}, {pipeline_mode = #tpu.pipeline_mode<synchronous>, transform_indices = @transform_5, window_bounds = array<i64: 1, 32>}, {pipeline_mode = #tpu.pipeline_mode<synchronous>, transform_indices = @transform_6, window_bounds = array<i64: 32, 32>}, {pipeline_mode = #tpu.pipeline_mode<synchronous>, transform_indices = @transform_7, window_bounds = array<i64: 1, 32>}, {pipeline_mode = #tpu.pipeline_mode<synchronous>, transform_indices = @transform_8, window_bounds = array<i64: 32, 32>}, {pipeline_mode = #tpu.pipeline_mode<synchronous>, transform_indices = @transform_9, window_bounds = array<i64: 1, 32>}, {transform_indices = @transform_10, window_bounds = array<i64: 1, 1, 8>}, {transform_indices = @transform_11, window_bounds = array<i64: 8, 8>}, {transform_indices = @transform_12, window_bounds = array<i64: 1, 8, 32>}]} {
    %c0 = arith.constant 0 : index
    %c0_0 = arith.constant 0 : index
    %c0_1 = arith.constant 0 : index
    %0 = vector.load %arg2[%c0, %c0_0, %c0_1] : memref<1x8x32xf32, #tpu.memory_space<vmem>>, vector<1x8x32xf32>
    %1 = vector.shape_cast %0 : vector<1x8x32xf32> to vector<8x32xf32>
    %c0_2 = arith.constant 0 : index
    %c0_3 = arith.constant 0 : index
    %c0_4 = arith.constant 0 : index
    %2 = vector.load %arg3[%c0_2, %c0_3, %c0_4] : memref<1x8x32xf32, #tpu.memory_space<vmem>>, vector<1x8x32xf32>
    %3 = vector.shape_cast %2 : vector<1x8x32xf32> to vector<8x32xf32>
    %c0_5 = arith.constant 0 : index
    %c0_6 = arith.constant 0 : index
    %4 = vector.load %arg4[%c0_5, %c0_6] : memref<32x32xf32, #tpu.memory_space<vmem>>, vector<32x32xf32>
    %cst = arith.constant dense<0.000000e+00> : vector<8x32xf32>
    %5 = tpu.matmul %1, %4, %cst {dimension_numbers = #tpu.dot_dimension_numbers<[1], [0], [0], [1], [0, 0, 1, 1], [], []>} : vector<8x32xf32>, vector<32x32xf32>, vector<8x32xf32> -> vector<8x32xf32>
    %c0_7 = arith.constant 0 : index
    %c0_8 = arith.constant 0 : index
    %6 = vector.load %arg5[%c0_7, %c0_8] : memref<1x32xf32, #tpu.memory_space<vmem>>, vector<1x32xf32>
    %7 = vector.broadcast %6 : vector<1x32xf32> to vector<8x32xf32>
    %8 = arith.addf %5, %7 : vector<8x32xf32>
    %c0_9 = arith.constant 0 : index
    %c0_10 = arith.constant 0 : index
    %9 = vector.load %arg6[%c0_9, %c0_10] : memref<32x32xf32, #tpu.memory_space<vmem>>, vector<32x32xf32>
    %cst_11 = arith.constant dense<0.000000e+00> : vector<8x32xf32>
    %10 = tpu.matmul %3, %9, %cst_11 {dimension_numbers = #tpu.dot_dimension_numbers<[1], [0], [0], [1], [0, 0, 1, 1], [], []>} : vector<8x32xf32>, vector<32x32xf32>, vector<8x32xf32> -> vector<8x32xf32>
    %c0_12 = arith.constant 0 : index
    %c0_13 = arith.constant 0 : index
    %11 = vector.load %arg7[%c0_12, %c0_13] : memref<1x32xf32, #tpu.memory_space<vmem>>, vector<1x32xf32>
    %12 = vector.broadcast %11 : vector<1x32xf32> to vector<8x32xf32>
    %13 = arith.addf %10, %12 : vector<8x32xf32>
    %c0_14 = arith.constant 0 : index
    %c0_15 = arith.constant 0 : index
    %14 = vector.load %arg8[%c0_14, %c0_15] : memref<32x32xf32, #tpu.memory_space<vmem>>, vector<32x32xf32>
    %cst_16 = arith.constant dense<0.000000e+00> : vector<8x32xf32>
    %15 = tpu.matmul %3, %14, %cst_16 {dimension_numbers = #tpu.dot_dimension_numbers<[1], [0], [0], [1], [0, 0, 1, 1], [], []>} : vector<8x32xf32>, vector<32x32xf32>, vector<8x32xf32> -> vector<8x32xf32>
    %c0_17 = arith.constant 0 : index
    %c0_18 = arith.constant 0 : index
    %16 = vector.load %arg9[%c0_17, %c0_18] : memref<1x32xf32, #tpu.memory_space<vmem>>, vector<1x32xf32>
    %17 = vector.broadcast %16 : vector<1x32xf32> to vector<8x32xf32>
    %18 = arith.addf %15, %17 : vector<8x32xf32>
    %c0_19 = arith.constant 0 : index
    %c0_20 = arith.constant 0 : index
    %19 = vector.load %arg13[%c0_19, %c0_20] : memref<8x8xf32, #tpu.memory_space<vmem>>, vector<8x8xf32>
    %c0_21 = arith.constant 0 : index
    %c0_22 = arith.constant 0 : index
    %c0_23 = arith.constant 0 : index
    %20 = vector.load %arg12[%c0_21, %c0_22, %c0_23] : memref<1x1x8xf32, #tpu.memory_space<vmem>>, vector<1x1x8xf32>
    %21 = vector.shape_cast %20 : vector<1x1x8xf32> to vector<1x8xf32>
    %22 = vector.broadcast %21 : vector<1x8xf32> to vector<8x8xf32>
    %23 = arith.addf %19, %22 : vector<8x8xf32>
    %c0_24 = arith.constant 0 : index
    %c0_25 = arith.constant 0 : index
    %24 = vector.load %arg10[%c0_24, %c0_25] : memref<32x32xf32, #tpu.memory_space<vmem>>, vector<32x32xf32>
    %cst_26 = arith.constant 0.000000e+00 : f32
    %25 = vector.broadcast %cst_26 : f32 to vector<8x32xf32>
    %26 = vector.extract_strided_slice %8 {offsets = [0, 0], sizes = [8, 8], strides = [1, 1]} : vector<8x32xf32> to vector<8x8xf32>
    %27 = vector.extract_strided_slice %13 {offsets = [0, 0], sizes = [8, 8], strides = [1, 1]} : vector<8x32xf32> to vector<8x8xf32>
    %28 = vector.extract_strided_slice %18 {offsets = [0, 0], sizes = [8, 8], strides = [1, 1]} : vector<8x32xf32> to vector<8x8xf32>
    %29 = tpu.transpose %27, [1, 0] : vector<8x8xf32> -> vector<8x8xf32>
    %cst_27 = arith.constant dense<0.000000e+00> : vector<8x8xf32>
    %30 = tpu.matmul %26, %29, %cst_27 {dimension_numbers = #tpu.dot_dimension_numbers<[1], [0], [0], [1], [0, 0, 1, 1], [], []>} : vector<8x8xf32>, vector<8x8xf32>, vector<8x8xf32> -> vector<8x8xf32>
    %cst_28 = arith.constant 0.176776692 : f32
    %31 = vector.broadcast %cst_28 : f32 to vector<8x8xf32>
    %32 = arith.mulf %30, %31 : vector<8x8xf32>
    %33 = arith.addf %32, %23 : vector<8x8xf32>
    %cst_29 = arith.constant dense<0xFF800000> : vector<8xf32>
    %34 = vector.multi_reduction <maximumf>, %33, %cst_29 [1] : vector<8x8xf32> to vector<8xf32>
    %35 = vector.shape_cast %34 : vector<8xf32> to vector<8x1xf32>
    %36 = vector.broadcast %35 : vector<8x1xf32> to vector<8x8xf32>
    %37 = arith.subf %33, %36 : vector<8x8xf32>
    %38 = math.exp %37 : vector<8x8xf32>
    %cst_30 = arith.constant dense<0.000000e+00> : vector<8xf32>
    %39 = vector.multi_reduction <add>, %38, %cst_30 [1] : vector<8x8xf32> to vector<8xf32>
    %40 = vector.shape_cast %39 : vector<8xf32> to vector<8x1xf32>
    %41 = tpu.reciprocal %40 {approx = true} : vector<8x1xf32> -> vector<8x1xf32>
    %42 = vector.broadcast %41 : vector<8x1xf32> to vector<8x8xf32>
    %43 = arith.mulf %38, %42 : vector<8x8xf32>
    %cst_31 = arith.constant dense<0.000000e+00> : vector<8x8xf32>
    %44 = tpu.matmul %43, %28, %cst_31 {dimension_numbers = #tpu.dot_dimension_numbers<[1], [0], [0], [1], [0, 0, 1, 1], [], []>} : vector<8x8xf32>, vector<8x8xf32>, vector<8x8xf32> -> vector<8x8xf32>
    %45 = vector.extract_strided_slice %24 {offsets = [0, 0], sizes = [8, 32], strides = [1, 1]} : vector<32x32xf32> to vector<8x32xf32>
    %cst_32 = arith.constant dense<0.000000e+00> : vector<8x32xf32>
    %46 = tpu.matmul %44, %45, %cst_32 {dimension_numbers = #tpu.dot_dimension_numbers<[1], [0], [0], [1], [0, 0, 1, 1], [], []>} : vector<8x8xf32>, vector<8x32xf32>, vector<8x32xf32> -> vector<8x32xf32>
    %47 = arith.addf %25, %46 : vector<8x32xf32>
    %48 = vector.extract_strided_slice %8 {offsets = [0, 8], sizes = [8, 8], strides = [1, 1]} : vector<8x32xf32> to vector<8x8xf32>
    %49 = vector.extract_strided_slice %13 {offsets = [0, 8], sizes = [8, 8], strides = [1, 1]} : vector<8x32xf32> to vector<8x8xf32>
    %50 = vector.extract_strided_slice %18 {offsets = [0, 8], sizes = [8, 8], strides = [1, 1]} : vector<8x32xf32> to vector<8x8xf32>
    %51 = tpu.transpose %49, [1, 0] : vector<8x8xf32> -> vector<8x8xf32>
    %cst_33 = arith.constant dense<0.000000e+00> : vector<8x8xf32>
    %52 = tpu.matmul %48, %51, %cst_33 {dimension_numbers = #tpu.dot_dimension_numbers<[1], [0], [0], [1], [0, 0, 1, 1], [], []>} : vector<8x8xf32>, vector<8x8xf32>, vector<8x8xf32> -> vector<8x8xf32>
    %cst_34 = arith.constant 0.176776692 : f32
    %53 = vector.broadcast %cst_34 : f32 to vector<8x8xf32>
    %54 = arith.mulf %52, %53 : vector<8x8xf32>
    %55 = arith.addf %54, %23 : vector<8x8xf32>
    %cst_35 = arith.constant dense<0xFF800000> : vector<8xf32>
    %56 = vector.multi_reduction <maximumf>, %55, %cst_35 [1] : vector<8x8xf32> to vector<8xf32>
    %57 = vector.shape_cast %56 : vector<8xf32> to vector<8x1xf32>
    %58 = vector.broadcast %57 : vector<8x1xf32> to vector<8x8xf32>
    %59 = arith.subf %55, %58 : vector<8x8xf32>
    %60 = math.exp %59 : vector<8x8xf32>
    %cst_36 = arith.constant dense<0.000000e+00> : vector<8xf32>
    %61 = vector.multi_reduction <add>, %60, %cst_36 [1] : vector<8x8xf32> to vector<8xf32>
    %62 = vector.shape_cast %61 : vector<8xf32> to vector<8x1xf32>
    %63 = tpu.reciprocal %62 {approx = true} : vector<8x1xf32> -> vector<8x1xf32>
    %64 = vector.broadcast %63 : vector<8x1xf32> to vector<8x8xf32>
    %65 = arith.mulf %60, %64 : vector<8x8xf32>
    %cst_37 = arith.constant dense<0.000000e+00> : vector<8x8xf32>
    %66 = tpu.matmul %65, %50, %cst_37 {dimension_numbers = #tpu.dot_dimension_numbers<[1], [0], [0], [1], [0, 0, 1, 1], [], []>} : vector<8x8xf32>, vector<8x8xf32>, vector<8x8xf32> -> vector<8x8xf32>
    %67 = vector.extract_strided_slice %24 {offsets = [8, 0], sizes = [8, 32], strides = [1, 1]} : vector<32x32xf32> to vector<8x32xf32>
    %cst_38 = arith.constant dense<0.000000e+00> : vector<8x32xf32>
    %68 = tpu.matmul %66, %67, %cst_38 {dimension_numbers = #tpu.dot_dimension_numbers<[1], [0], [0], [1], [0, 0, 1, 1], [], []>} : vector<8x8xf32>, vector<8x32xf32>, vector<8x32xf32> -> vector<8x32xf32>
    %69 = arith.addf %47, %68 : vector<8x32xf32>
    %70 = vector.extract_strided_slice %8 {offsets = [0, 16], sizes = [8, 8], strides = [1, 1]} : vector<8x32xf32> to vector<8x8xf32>
    %71 = vector.extract_strided_slice %13 {offsets = [0, 16], sizes = [8, 8], strides = [1, 1]} : vector<8x32xf32> to vector<8x8xf32>
    %72 = vector.extract_strided_slice %18 {offsets = [0, 16], sizes = [8, 8], strides = [1, 1]} : vector<8x32xf32> to vector<8x8xf32>
    %73 = tpu.transpose %71, [1, 0] : vector<8x8xf32> -> vector<8x8xf32>
    %cst_39 = arith.constant dense<0.000000e+00> : vector<8x8xf32>
    %74 = tpu.matmul %70, %73, %cst_39 {dimension_numbers = #tpu.dot_dimension_numbers<[1], [0], [0], [1], [0, 0, 1, 1], [], []>} : vector<8x8xf32>, vector<8x8xf32>, vector<8x8xf32> -> vector<8x8xf32>
    %cst_40 = arith.constant 0.176776692 : f32
    %75 = vector.broadcast %cst_40 : f32 to vector<8x8xf32>
    %76 = arith.mulf %74, %75 : vector<8x8xf32>
    %77 = arith.addf %76, %23 : vector<8x8xf32>
    %cst_41 = arith.constant dense<0xFF800000> : vector<8xf32>
    %78 = vector.multi_reduction <maximumf>, %77, %cst_41 [1] : vector<8x8xf32> to vector<8xf32>
    %79 = vector.shape_cast %78 : vector<8xf32> to vector<8x1xf32>
    %80 = vector.broadcast %79 : vector<8x1xf32> to vector<8x8xf32>
    %81 = arith.subf %77, %80 : vector<8x8xf32>
    %82 = math.exp %81 : vector<8x8xf32>
    %cst_42 = arith.constant dense<0.000000e+00> : vector<8xf32>
    %83 = vector.multi_reduction <add>, %82, %cst_42 [1] : vector<8x8xf32> to vector<8xf32>
    %84 = vector.shape_cast %83 : vector<8xf32> to vector<8x1xf32>
    %85 = tpu.reciprocal %84 {approx = true} : vector<8x1xf32> -> vector<8x1xf32>
    %86 = vector.broadcast %85 : vector<8x1xf32> to vector<8x8xf32>
    %87 = arith.mulf %82, %86 : vector<8x8xf32>
    %cst_43 = arith.constant dense<0.000000e+00> : vector<8x8xf32>
    %88 = tpu.matmul %87, %72, %cst_43 {dimension_numbers = #tpu.dot_dimension_numbers<[1], [0], [0], [1], [0, 0, 1, 1], [], []>} : vector<8x8xf32>, vector<8x8xf32>, vector<8x8xf32> -> vector<8x8xf32>
    %89 = vector.extract_strided_slice %24 {offsets = [16, 0], sizes = [8, 32], strides = [1, 1]} : vector<32x32xf32> to vector<8x32xf32>
    %cst_44 = arith.constant dense<0.000000e+00> : vector<8x32xf32>
    %90 = tpu.matmul %88, %89, %cst_44 {dimension_numbers = #tpu.dot_dimension_numbers<[1], [0], [0], [1], [0, 0, 1, 1], [], []>} : vector<8x8xf32>, vector<8x32xf32>, vector<8x32xf32> -> vector<8x32xf32>
    %91 = arith.addf %69, %90 : vector<8x32xf32>
    %92 = vector.extract_strided_slice %8 {offsets = [0, 24], sizes = [8, 8], strides = [1, 1]} : vector<8x32xf32> to vector<8x8xf32>
    %93 = vector.extract_strided_slice %13 {offsets = [0, 24], sizes = [8, 8], strides = [1, 1]} : vector<8x32xf32> to vector<8x8xf32>
    %94 = vector.extract_strided_slice %18 {offsets = [0, 24], sizes = [8, 8], strides = [1, 1]} : vector<8x32xf32> to vector<8x8xf32>
    %95 = tpu.transpose %93, [1, 0] : vector<8x8xf32> -> vector<8x8xf32>
    %cst_45 = arith.constant dense<0.000000e+00> : vector<8x8xf32>
    %96 = tpu.matmul %92, %95, %cst_45 {dimension_numbers = #tpu.dot_dimension_numbers<[1], [0], [0], [1], [0, 0, 1, 1], [], []>} : vector<8x8xf32>, vector<8x8xf32>, vector<8x8xf32> -> vector<8x8xf32>
    %cst_46 = arith.constant 0.176776692 : f32
    %97 = vector.broadcast %cst_46 : f32 to vector<8x8xf32>
    %98 = arith.mulf %96, %97 : vector<8x8xf32>
    %99 = arith.addf %98, %23 : vector<8x8xf32>
    %cst_47 = arith.constant dense<0xFF800000> : vector<8xf32>
    %100 = vector.multi_reduction <maximumf>, %99, %cst_47 [1] : vector<8x8xf32> to vector<8xf32>
    %101 = vector.shape_cast %100 : vector<8xf32> to vector<8x1xf32>
    %102 = vector.broadcast %101 : vector<8x1xf32> to vector<8x8xf32>
    %103 = arith.subf %99, %102 : vector<8x8xf32>
    %104 = math.exp %103 : vector<8x8xf32>
    %cst_48 = arith.constant dense<0.000000e+00> : vector<8xf32>
    %105 = vector.multi_reduction <add>, %104, %cst_48 [1] : vector<8x8xf32> to vector<8xf32>
    %106 = vector.shape_cast %105 : vector<8xf32> to vector<8x1xf32>
    %107 = tpu.reciprocal %106 {approx = true} : vector<8x1xf32> -> vector<8x1xf32>
    %108 = vector.broadcast %107 : vector<8x1xf32> to vector<8x8xf32>
    %109 = arith.mulf %104, %108 : vector<8x8xf32>
    %cst_49 = arith.constant dense<0.000000e+00> : vector<8x8xf32>
    %110 = tpu.matmul %109, %94, %cst_49 {dimension_numbers = #tpu.dot_dimension_numbers<[1], [0], [0], [1], [0, 0, 1, 1], [], []>} : vector<8x8xf32>, vector<8x8xf32>, vector<8x8xf32> -> vector<8x8xf32>
    %111 = vector.extract_strided_slice %24 {offsets = [24, 0], sizes = [8, 32], strides = [1, 1]} : vector<32x32xf32> to vector<8x32xf32>
    %cst_50 = arith.constant dense<0.000000e+00> : vector<8x32xf32>
    %112 = tpu.matmul %110, %111, %cst_50 {dimension_numbers = #tpu.dot_dimension_numbers<[1], [0], [0], [1], [0, 0, 1, 1], [], []>} : vector<8x8xf32>, vector<8x32xf32>, vector<8x32xf32> -> vector<8x32xf32>
    %113 = arith.addf %91, %112 : vector<8x32xf32>
    %c0_51 = arith.constant 0 : index
    %c0_52 = arith.constant 0 : index
    %114 = vector.load %arg11[%c0_51, %c0_52] : memref<1x32xf32, #tpu.memory_space<vmem>>, vector<1x32xf32>
    %115 = vector.broadcast %114 : vector<1x32xf32> to vector<8x32xf32>
    %116 = arith.addf %113, %115 : vector<8x32xf32>
    %c0_53 = arith.constant 0 : index
    %c0_54 = arith.constant 0 : index
    %c0_55 = arith.constant 0 : index
    %117 = vector.load %arg14[%c0_53, %c0_54, %c0_55] : memref<1x8x32xf32, #tpu.memory_space<vmem>>, vector<1x8x32xf32>
    %118 = vector.shape_cast %117 : vector<1x8x32xf32> to vector<8x32xf32>
    %119 = vector.shape_cast %116 : vector<8x32xf32> to vector<1x8x32xf32>
    tpu.vector_store %arg14[%c0_53, %c0_54, %c0_55], %119 {strides = array<i32>} : memref<1x8x32xf32, #tpu.memory_space<vmem>>, vector<1x8x32xf32>,
    return
  }
  func.func @transform_0(%arg0: i32, %arg1: i32) -> (i32, i32, i32) {
    %c0_i32 = arith.constant 0 : i32
    %c0_i32_0 = arith.constant 0 : i32
    return %arg0, %arg1, %c0_i32 : i32, i32, i32
  }
  func.func @transform_1(%arg0: i32, %arg1: i32) -> (i32, i32, i32) {
    %c0_i32 = arith.constant 0 : i32
    %c0_i32_0 = arith.constant 0 : i32
    %c0_i32_1 = arith.constant 0 : i32
    return %arg0, %c0_i32, %c0_i32_0 : i32, i32, i32
  }
  func.func @transform_2(%arg0: i32, %arg1: i32) -> (i32, i32) {
    %c0_i32 = arith.constant 0 : i32
    %c0_i32_0 = arith.constant 0 : i32
    %c0_i32_1 = arith.constant 0 : i32
    return %c0_i32, %c0_i32_0 : i32, i32
  }
  func.func @transform_3(%arg0: i32, %arg1: i32) -> (i32, i32) {
    %c0_i32 = arith.constant 0 : i32
    %c0_i32_0 = arith.constant 0 : i32
    %c0_i32_1 = arith.constant 0 : i32
    return %c0_i32, %c0_i32_0 : i32, i32
  }
  func.func @transform_4(%arg0: i32, %arg1: i32) -> (i32, i32) {
    %c0_i32 = arith.constant 0 : i32
    %c0_i32_0 = arith.constant 0 : i32
    %c0_i32_1 = arith.constant 0 : i32
    return %c0_i32, %c0_i32_0 : i32, i32
  }
  func.func @transform_5(%arg0: i32, %arg1: i32) -> (i32, i32) {
    %c0_i32 = arith.constant 0 : i32
    %c0_i32_0 = arith.constant 0 : i32
    %c0_i32_1 = arith.constant 0 : i32
    return %c0_i32, %c0_i32_0 : i32, i32
  }
  func.func @transform_6(%arg0: i32, %arg1: i32) -> (i32, i32) {
    %c0_i32 = arith.constant 0 : i32
    %c0_i32_0 = arith.constant 0 : i32
    %c0_i32_1 = arith.constant 0 : i32
    return %c0_i32, %c0_i32_0 : i32, i32
  }
  func.func @transform_7(%arg0: i32, %arg1: i32) -> (i32, i32) {
    %c0_i32 = arith.constant 0 : i32
    %c0_i32_0 = arith.constant 0 : i32
    %c0_i32_1 = arith.constant 0 : i32
    return %c0_i32, %c0_i32_0 : i32, i32
  }
  func.func @transform_8(%arg0: i32, %arg1: i32) -> (i32, i32) {
    %c0_i32 = arith.constant 0 : i32
    %c0_i32_0 = arith.constant 0 : i32
    %c0_i32_1 = arith.constant 0 : i32
    return %c0_i32, %c0_i32_0 : i32, i32
  }
  func.func @transform_9(%arg0: i32, %arg1: i32) -> (i32, i32) {
    %c0_i32 = arith.constant 0 : i32
    %c0_i32_0 = arith.constant 0 : i32
    %c0_i32_1 = arith.constant 0 : i32
    return %c0_i32, %c0_i32_0 : i32, i32
  }
  func.func @transform_10(%arg0: i32, %arg1: i32) -> (i32, i32, i32) {
    %c0_i32 = arith.constant 0 : i32
    %c0_i32_0 = arith.constant 0 : i32
    %c0_i32_1 = arith.constant 0 : i32
    return %arg0, %c0_i32, %c0_i32_0 : i32, i32, i32
  }
  func.func @transform_11(%arg0: i32, %arg1: i32) -> (i32, i32) {
    %c0_i32 = arith.constant 0 : i32
    %c0_i32_0 = arith.constant 0 : i32
    return %arg1, %c0_i32 : i32, i32
  }
  func.func @transform_12(%arg0: i32, %arg1: i32) -> (i32, i32, i32) {
    %c0_i32 = arith.constant 0 : i32
    %c0_i32_0 = arith.constant 0 : i32
    return %arg0, %arg1, %c0_i32 : i32, i32, i32
  }
}

</mosaic_0001>

<llo_original>
// kernel: tpu_custom_call.1
$region0: #{tpu_custom_call.1}
  #allocation0 [shape = 'u32[]', space=smem, size = 0x4, offset = 0x4, fixed_abs, tag = 'smem constant byte address 0x4 - core index']
  #allocation1 [shape = 'u32[144,128]{1,0:T(1,128)}', space=vmem, size = 0x12000, scoped, tag = 'internal scratch']
  %s0 = inlined_call_operand.hbm [shape: f32[2,8,32], index: 0, kind: input, shape index: {}]
  %s1 = inlined_call_operand.hbm [shape: f32[2,8,32], index: 1, kind: input, shape index: {}]
  %s2 = inlined_call_operand.hbm [shape: f32[32,32], index: 2, kind: input, shape index: {}]
  %s3 = inlined_call_operand.vmem [shape: f32[1,32], index: 3, kind: input, shape index: {}]
  %s4 = inlined_call_operand.hbm [shape: f32[32,32], index: 4, kind: input, shape index: {}]
  %s5 = inlined_call_operand.vmem [shape: f32[1,32], index: 5, kind: input, shape index: {}]
  %s6 = inlined_call_operand.hbm [shape: f32[32,32], index: 6, kind: input, shape index: {}]
  %s7 = inlined_call_operand.vmem [shape: f32[1,32], index: 7, kind: input, shape index: {}]
  %s8 = inlined_call_operand.hbm [shape: f32[32,32], index: 8, kind: input, shape index: {}]
  %s9 = inlined_call_operand.vmem [shape: f32[1,32], index: 9, kind: input, shape index: {}]
  %s10 = inlined_call_operand.vmem [shape: f32[2,1,8], index: 10, kind: input, shape index: {}]
  %s11 = inlined_call_operand.vmem [shape: f32[8,8], index: 11, kind: input, shape index: {}]
  %s12 = inlined_call_operand.hbm [shape: f32[2,8,32], index: 12, kind: output, shape index: {}]
  %s13 = sld [smem:[#allocation0]]
  $region105: #{tpu_custom_call.1} parent=0
    _
  %s15 = ssub.s32 1, %s13
  %s16 = scalar_select 0, %s15, %s13
  $region1: #{tpu_custom_call.1} parent=0
    #allocation2 [shape = 'u8[8192]{0}', space=vmem, size = 0x2000, scoped, tag = 'input window, operand 0']
    #allocation3 [shape = 's32[2]{0}', space=sflag, size = 0x8, scoped, tag = 'scoped memory for tpu_custom_call.1']
    #allocation4 [shape = 's32[2]{0}', space=sflag, size = 0x8, scoped, tag = 'scoped memory for tpu_custom_call.1']
    #allocation5 [shape = 'u8[8192]{0}', space=vmem, size = 0x2000, scoped, tag = 'input window, operand 1']
    #allocation6 [shape = 's32[2]{0}', space=sflag, size = 0x8, scoped, tag = 'scoped memory for tpu_custom_call.1']
    #allocation7 [shape = 'u8[16384]{0}', space=vmem, size = 0x4000, scoped, tag = 'input window, operand 2, single buffered']
    #allocation8 [shape = 'u8[16384]{0}', space=vmem, size = 0x4000, scoped, tag = 'input window, operand 4, single buffered']
    #allocation9 [shape = 's32[1]{0}', space=sflag, size = 0x4, scoped, tag = 'scoped memory for tpu_custom_call.1']
    #allocation10 [shape = 'u8[16384]{0}', space=vmem, size = 0x4000, scoped, tag = 'input window, operand 6, single buffered']
    #allocation11 [shape = 'u8[16384]{0}', space=vmem, size = 0x4000, scoped, tag = 'input window, operand 8, single buffered']
    #allocation12 [shape = 's32[1]{0}', space=sflag, size = 0x4, scoped, tag = 'scoped memory for tpu_custom_call.1']
    #allocation13 [shape = 'u8[8192]{0}', space=vmem, size = 0x2000, scoped, tag = 'output window, operand 0']
    %17 = vsyncpa [#allocation3], 0
    %s18 = scalar_lea.sflag [#allocation3], 1
    %19 = vsyncpa %s18, 0
    %20 = vsyncpa [#allocation6], 0
    %s21 = scalar_lea.sflag [#allocation6], 1
    %22 = vsyncpa %s21, 0
    %23 = vsyncpa [#allocation9], 0
    %24 = vsyncpa [#allocation12], 0
    %25 = vsyncpa [#allocation4], 0
    %s26 = scalar_lea.sflag [#allocation4], 1
    %27 = vsyncpa %s26, 0
    loop: start=0, step=1, limit=4
    $region2: #{tpu_custom_call.1} parent=1 // loop_pre_header
      _
    $region3: #{tpu_custom_call.1} parent=1 // loop_header
      %s29 = sphi 0, %s33
      %p30 = scmp.ge.s32.totalorder %s29, 4
      %s36 = sphi 0, %s48
      %s37 = sphi 0, %s44
      %s38 = sphi 0, %s36
      %s39 = sphi 0, %s37
      %s40 = sphi 0, %s38
      %s41 = sphi 0, %s39
      %s53 = sphi 0, %s55
      %s56 = sphi 0, %s53
      %s57 = sphi 0, %s56
      %s73 = sphi 0, %s57
      %s79 = sphi 0, %s81
      %s82 = sphi 0, %s79
      %s83 = sphi 0, %s82
      %s99 = sphi 0, %s83
      %s103 = sphi 0, %s103
      %s105 = sphi 0, %s103
      %s106 = sphi 0, %s105
      %s120 = sphi 0, %s106
      %s124 = sphi 0, %s124
      %s126 = sphi 0, %s124
      %s127 = sphi 0, %s126
      %s141 = sphi 0, %s127
      %s145 = sphi 0, %s145
      %s147 = sphi 0, %s145
      %s148 = sphi 0, %s147
      %s162 = sphi 0, %s148
      %s166 = sphi 0, %s166
      %s168 = sphi 0, %s166
      %s169 = sphi 0, %s168
      %s183 = sphi 0, %s169
      %s187 = sphi 0, %s187
      %s189 = sphi 0, %s187
      %s190 = sphi 0, %s189
      %s204 = sphi 0, %s190
      %s208 = sphi 0, %s208
      %s210 = sphi 0, %s208
      %s211 = sphi 0, %s210
      %s225 = sphi 0, %s211
      %s229 = sphi 0, %s229
      %s231 = sphi 0, %s229
      %s232 = sphi 0, %s231
      %s246 = sphi 0, %s232
      %s250 = sphi 0, %s250
      %s252 = sphi 0, %s250
      %s253 = sphi 0, %s252
      %s267 = sphi 0, %s253
      %s273 = sphi 0, %s275
      %s276 = sphi 0, %s273
      %s277 = sphi 0, %s276
      %s293 = sphi 0, %s277
      %s299 = sphi 0, %s301
      %s302 = sphi 0, %s299
      %s303 = sphi 0, %s302
      %s319 = sphi 0, %s303
      %s327 = sphi 0, %s329
      %s330 = sphi 0, %s327
      %s331 = sphi 0, %s330
      %s347 = sphi 0, %s331
    $region4: #{tpu_custom_call.1} parent=1 // loop_header_branch
      %32 = sbr.rel (%p30) target = $region8
    $region5: #{tpu_custom_call.1} parent=1 // loop_body
      %s34 = ssub.s32 %s29, 1
      %s35 = ssub.s32 %s29, 2
      %s42 = sadd.s32 1, %s37
      %p43 = scmp.ge.s32.totalorder %s42, 1
      %s44 = scalar_select %p43, 0, %s42
      %s45 = sadd.s32 1, %s36
      %s46 = scalar_select %p43, %s45, %s36
      %p47 = scmp.ge.s32.totalorder %s46, 2
      %s48 = scalar_select %p47, 0, %s46
      %s49 = ssub.s32 %s36, %s48
      %s50 = ssub.s32 %s37, %s44
      %s51 = sor.u32 %s49, %s50
      %p52 = scmp.eq.s32.totalorder %s51, 0
      %s54 = sadd.s32 %s53, 1
      %s55 = scalar_select %p52, %s53, %s54
      %p58 = pneg %p52
      %p59 = scmp.eq.s32.totalorder %s29, 1
      %p60 = por %p58, %p59
      %p61 = scmp.ne.s32.totalorder %s53, %s56
      %p62 = scmp.eq.s32.totalorder %s29, 0
      %p63 = por %p61, %p62
      %p64 = scmp.ne.s32.totalorder %s53, %s56
      %p65 = scmp.eq.s32.totalorder %s34, 1
      %p66 = por %p64, %p65
      %p67 = scmp.ne.s32.totalorder %s56, %s57
      %p68 = scmp.eq.s32.totalorder %s34, 0
      %p69 = por %p67, %p68
      %p70 = scmp.ne.s32.totalorder %s56, %s57
      %p71 = scmp.eq.s32.totalorder %s35, 1
      %p72 = por %p70, %p71
      %p74 = scmp.ne.s32.totalorder %s57, %s73
      %p75 = scmp.eq.s32.totalorder %s35, 0
      %p76 = por %p74, %p75
      %s77 = ssub.s32 %s36, %s48
      %p78 = scmp.eq.s32.totalorder %s77, 0
      %s80 = sadd.s32 %s79, 1
      %s81 = scalar_select %p78, %s79, %s80
      %p84 = pneg %p78
      %p85 = scmp.eq.s32.totalorder %s29, 1
      %p86 = por %p84, %p85
      %p87 = scmp.ne.s32.totalorder %s79, %s82
      %p88 = scmp.eq.s32.totalorder %s29, 0
      %p89 = por %p87, %p88
      %p90 = scmp.ne.s32.totalorder %s79, %s82
      %p91 = scmp.eq.s32.totalorder %s34, 1
      %p92 = por %p90, %p91
      %p93 = scmp.ne.s32.totalorder %s82, %s83
      %p94 = scmp.eq.s32.totalorder %s34, 0
      %p95 = por %p93, %p94
      %p96 = scmp.ne.s32.totalorder %s82, %s83
      %p97 = scmp.eq.s32.totalorder %s35, 1
      %p98 = por %p96, %p97
      %p100 = scmp.ne.s32.totalorder %s83, %s99
      %p101 = scmp.eq.s32.totalorder %s35, 0
      %p102 = por %p100, %p101
      %s104 = sadd.s32 %s103, 1
      %p107 = scmp.eq.s32.totalorder %s29, 1
      %p108 = scmp.ne.s32.totalorder %s103, %s105
      %p109 = scmp.eq.s32.totalorder %s29, 0
      %p110 = por %p108, %p109
      %p111 = scmp.ne.s32.totalorder %s103, %s105
      %p112 = scmp.eq.s32.totalorder %s34, 1
      %p113 = por %p111, %p112
      %p114 = scmp.ne.s32.totalorder %s105, %s106
      %p115 = scmp.eq.s32.totalorder %s34, 0
      %p116 = por %p114, %p115
      %p117 = scmp.ne.s32.totalorder %s105, %s106
      %p118 = scmp.eq.s32.totalorder %s35, 1
      %p119 = por %p117, %p118
      %p121 = scmp.ne.s32.totalorder %s106, %s120
      %p122 = scmp.eq.s32.totalorder %s35, 0
      %p123 = por %p121, %p122
      %s125 = sadd.s32 %s124, 1
      %p128 = scmp.eq.s32.totalorder %s29, 1
      %p129 = scmp.ne.s32.totalorder %s124, %s126
      %p130 = scmp.eq.s32.totalorder %s29, 0
      %p131 = por %p129, %p130
      %p132 = scmp.ne.s32.totalorder %s124, %s126
      %p133 = scmp.eq.s32.totalorder %s34, 1
      %p134 = por %p132, %p133
      %p135 = scmp.ne.s32.totalorder %s126, %s127
      %p136 = scmp.eq.s32.totalorder %s34, 0
      %p137 = por %p135, %p136
      %p138 = scmp.ne.s32.totalorder %s126, %s127
      %p139 = scmp.eq.s32.totalorder %s35, 1
      %p140 = por %p138, %p139
      %p142 = scmp.ne.s32.totalorder %s127, %s141
      %p143 = scmp.eq.s32.totalorder %s35, 0
      %p144 = por %p142, %p143
      %s146 = sadd.s32 %s145, 1
      %p149 = scmp.eq.s32.totalorder %s29, 1
      %p150 = scmp.ne.s32.totalorder %s145, %s147
      %p151 = scmp.eq.s32.totalorder %s29, 0
      %p152 = por %p150, %p151
      %p153 = scmp.ne.s32.totalorder %s145, %s147
      %p154 = scmp.eq.s32.totalorder %s34, 1
      %p155 = por %p153, %p154
      %p156 = scmp.ne.s32.totalorder %s147, %s148
      %p157 = scmp.eq.s32.totalorder %s34, 0
      %p158 = por %p156, %p157
      %p159 = scmp.ne.s32.totalorder %s147, %s148
      %p160 = scmp.eq.s32.totalorder %s35, 1
      %p161 = por %p159, %p160
      %p163 = scmp.ne.s32.totalorder %s148, %s162
      %p164 = scmp.eq.s32.totalorder %s35, 0
      %p165 = por %p163, %p164
      %s167 = sadd.s32 %s166, 1
      %p170 = scmp.eq.s32.totalorder %s29, 1
      %p171 = scmp.ne.s32.totalorder %s166, %s168
      %p172 = scmp.eq.s32.totalorder %s29, 0
      %p173 = por %p171, %p172
      %p174 = scmp.ne.s32.totalorder %s166, %s168
      %p175 = scmp.eq.s32.totalorder %s34, 1
      %p176 = por %p174, %p175
      %p177 = scmp.ne.s32.totalorder %s168, %s169
      %p178 = scmp.eq.s32.totalorder %s34, 0
      %p179 = por %p177, %p178
      %p180 = scmp.ne.s32.totalorder %s168, %s169
      %p181 = scmp.eq.s32.totalorder %s35, 1
      %p182 = por %p180, %p181
      %p184 = scmp.ne.s32.totalorder %s169, %s183
      %p185 = scmp.eq.s32.totalorder %s35, 0
      %p186 = por %p184, %p185
      %s188 = sadd.s32 %s187, 1
      %p191 = scmp.eq.s32.totalorder %s29, 1
      %p192 = scmp.ne.s32.totalorder %s187, %s189
      %p193 = scmp.eq.s32.totalorder %s29, 0
      %p194 = por %p192, %p193
      %p195 = scmp.ne.s32.totalorder %s187, %s189
      %p196 = scmp.eq.s32.totalorder %s34, 1
      %p197 = por %p195, %p196
      %p198 = scmp.ne.s32.totalorder %s189, %s190
      %p199 = scmp.eq.s32.totalorder %s34, 0
      %p200 = por %p198, %p199
      %p201 = scmp.ne.s32.totalorder %s189, %s190
      %p202 = scmp.eq.s32.totalorder %s35, 1
      %p203 = por %p201, %p202
      %p205 = scmp.ne.s32.totalorder %s190, %s204
      %p206 = scmp.eq.s32.totalorder %s35, 0
      %p207 = por %p205, %p206
      %s209 = sadd.s32 %s208, 1
      %p212 = scmp.eq.s32.totalorder %s29, 1
      %p213 = scmp.ne.s32.totalorder %s208, %s210
      %p214 = scmp.eq.s32.totalorder %s29, 0
      %p215 = por %p213, %p214
      %p216 = scmp.ne.s32.totalorder %s208, %s210
      %p217 = scmp.eq.s32.totalorder %s34, 1
      %p218 = por %p216, %p217
      %p219 = scmp.ne.s32.totalorder %s210, %s211
      %p220 = scmp.eq.s32.totalorder %s34, 0
      %p221 = por %p219, %p220
      %p222 = scmp.ne.s32.totalorder %s210, %s211
      %p223 = scmp.eq.s32.totalorder %s35, 1
      %p224 = por %p222, %p223
      %p226 = scmp.ne.s32.totalorder %s211, %s225
      %p227 = scmp.eq.s32.totalorder %s35, 0
      %p228 = por %p226, %p227
      %s230 = sadd.s32 %s229, 1
      %p233 = scmp.eq.s32.totalorder %s29, 1
      %p234 = scmp.ne.s32.totalorder %s229, %s231
      %p235 = scmp.eq.s32.totalorder %s29, 0
      %p236 = por %p234, %p235
      %p237 = scmp.ne.s32.totalorder %s229, %s231
      %p238 = scmp.eq.s32.totalorder %s34, 1
      %p239 = por %p237, %p238
      %p240 = scmp.ne.s32.totalorder %s231, %s232
      %p241 = scmp.eq.s32.totalorder %s34, 0
      %p242 = por %p240, %p241
      %p243 = scmp.ne.s32.totalorder %s231, %s232
      %p244 = scmp.eq.s32.totalorder %s35, 1
      %p245 = por %p243, %p244
      %p247 = scmp.ne.s32.totalorder %s232, %s246
      %p248 = scmp.eq.s32.totalorder %s35, 0
      %p249 = por %p247, %p248
      %s251 = sadd.s32 %s250, 1
      %p254 = scmp.eq.s32.totalorder %s29, 1
      %p255 = scmp.ne.s32.totalorder %s250, %s252
      %p256 = scmp.eq.s32.totalorder %s29, 0
      %p257 = por %p255, %p256
      %p258 = scmp.ne.s32.totalorder %s250, %s252
      %p259 = scmp.eq.s32.totalorder %s34, 1
      %p260 = por %p258, %p259
      %p261 = scmp.ne.s32.totalorder %s252, %s253
      %p262 = scmp.eq.s32.totalorder %s34, 0
      %p263 = por %p261, %p262
      %p264 = scmp.ne.s32.totalorder %s252, %s253
      %p265 = scmp.eq.s32.totalorder %s35, 1
      %p266 = por %p264, %p265
      %p268 = scmp.ne.s32.totalorder %s253, %s267
      %p269 = scmp.eq.s32.totalorder %s35, 0
      %p270 = por %p268, %p269
      %s271 = ssub.s32 %s36, %s48
      %p272 = scmp.eq.s32.totalorder %s271, 0
      %s274 = sadd.s32 %s273, 1
      %s275 = scalar_select %p272, %s273, %s274
      %p278 = pneg %p272
      %p279 = scmp.eq.s32.totalorder %s29, 1
      %p280 = por %p278, %p279
      %p281 = scmp.ne.s32.totalorder %s273, %s276
      %p282 = scmp.eq.s32.totalorder %s29, 0
      %p283 = por %p281, %p282
      %p284 = scmp.ne.s32.totalorder %s273, %s276
      %p285 = scmp.eq.s32.totalorder %s34, 1
      %p286 = por %p284, %p285
      %p287 = scmp.ne.s32.totalorder %s276, %s277
      %p288 = scmp.eq.s32.totalorder %s34, 0
      %p289 = por %p287, %p288
      %p290 = scmp.ne.s32.totalorder %s276, %s277
      %p291 = scmp.eq.s32.totalorder %s35, 1
      %p292 = por %p290, %p291
      %p294 = scmp.ne.s32.totalorder %s277, %s293
      %p295 = scmp.eq.s32.totalorder %s35, 0
      %p296 = por %p294, %p295
      %s297 = ssub.s32 %s37, %s44
      %p298 = scmp.eq.s32.totalorder %s297, 0
      %s300 = sadd.s32 %s299, 1
      %s301 = scalar_select %p298, %s299, %s300
      %p304 = pneg %p298
      %p305 = scmp.eq.s32.totalorder %s29, 1
      %p306 = por %p304, %p305
      %p307 = scmp.ne.s32.totalorder %s299, %s302
      %p308 = scmp.eq.s32.totalorder %s29, 0
      %p309 = por %p307, %p308
      %p310 = scmp.ne.s32.totalorder %s299, %s302
      %p311 = scmp.eq.s32.totalorder %s34, 1
      %p312 = por %p310, %p311
      %p313 = scmp.ne.s32.totalorder %s302, %s303
      %p314 = scmp.eq.s32.totalorder %s34, 0
      %p315 = por %p313, %p314
      %p316 = scmp.ne.s32.totalorder %s302, %s303
      %p317 = scmp.eq.s32.totalorder %s35, 1
      %p318 = por %p316, %p317
      %p320 = scmp.ne.s32.totalorder %s303, %s319
      %p321 = scmp.eq.s32.totalorder %s35, 0
      %p322 = por %p320, %p321
      %s323 = ssub.s32 %s36, %s48
      %s324 = ssub.s32 %s37, %s44
      %s325 = sor.u32 %s323, %s324
      %p326 = scmp.eq.s32.totalorder %s325, 0
      %s328 = sadd.s32 %s327, 1
      %s329 = scalar_select %p326, %s327, %s328
      %p332 = pneg %p326
      %p333 = scmp.eq.s32.totalorder %s29, 1
      %p334 = por %p332, %p333
      %p335 = scmp.ne.s32.totalorder %s327, %s330
      %p336 = scmp.eq.s32.totalorder %s29, 0
      %p337 = por %p335, %p336
      %p338 = scmp.ne.s32.totalorder %s327, %s330
      %p339 = scmp.eq.s32.totalorder %s34, 1
      %p340 = por %p338, %p339
      %p341 = scmp.ne.s32.totalorder %s330, %s331
      %p342 = scmp.eq.s32.totalorder %s34, 0
      %p343 = por %p341, %p342
      %p344 = scmp.ne.s32.totalorder %s330, %s331
      %p345 = scmp.eq.s32.totalorder %s35, 1
      %p346 = por %p344, %p345
      %p348 = scmp.ne.s32.totalorder %s331, %s347
      %p349 = scmp.eq.s32.totalorder %s35, 0
      %p350 = por %p348, %p349
      %p351 = scmp.le.s32.totalorder 1, %s29
      %p352 = scmp.lt.s32.totalorder %s29, 3
      %p353 = pnand %p351, %p352
      %p354 = pneg %p353
      // Predicated region
      $region9: #{tpu_custom_call.1} parent=5 // pred_check
        _
      $region10: #{tpu_custom_call.1} parent=5 // pred_check_branch
        %356 = sbr.rel (%p353) target = $region12
      $region11: #{tpu_custom_call.1} parent=5 // pred_region
        %s357 = ssub.s32 %s29, 1
        // Predicated region
        $region13: #{tpu_custom_call.1} parent=11 // pred_check
          %p358 = pneg %p116
        $region14: #{tpu_custom_call.1} parent=11 // pred_check_branch
          %360 = sbr.rel (%p358) target = $region16
        $region15: #{tpu_custom_call.1} parent=11 // pred_region
          %s362 = ssub.s32 512, 512
          %363 = vsyncadd [#allocation6], %s362
          %s364 = sshll.u32 [#allocation7], 4
          %s365 = int_to_ptr.vmem [resolvable:$true] %s364
          %370 = dma.hbm_to_vmem [thread:$0]  %s2, 512, %s365, [#allocation6], 128, 128, 8
        $region16: #{tpu_custom_call.1} parent=11 // pred_fallthru
          _
        // Predicated region
        $region17: #{tpu_custom_call.1} parent=11 // pred_check
          %p371 = pneg %p137
        $region18: #{tpu_custom_call.1} parent=11 // pred_check_branch
          %373 = sbr.rel (%p371) target = $region20
        $region19: #{tpu_custom_call.1} parent=11 // pred_region
          _
        $region20: #{tpu_custom_call.1} parent=11 // pred_fallthru
          _
        // Predicated region
        $region21: #{tpu_custom_call.1} parent=11 // pred_check
          %p374 = pneg %p158
        $region22: #{tpu_custom_call.1} parent=11 // pred_check_branch
          %376 = sbr.rel (%p374) target = $region24
        $region23: #{tpu_custom_call.1} parent=11 // pred_region
          %s378 = ssub.s32 512, 512
          %379 = vsyncadd [#allocation9], %s378
          %s380 = sshll.u32 [#allocation8], 4
          %s381 = int_to_ptr.vmem [resolvable:$true] %s380
          %386 = dma.hbm_to_vmem [thread:$0]  %s4, 512, %s381, [#allocation9], 128, 128, 8
        $region24: #{tpu_custom_call.1} parent=11 // pred_fallthru
          _
        // Predicated region
        $region25: #{tpu_custom_call.1} parent=11 // pred_check
          %p387 = pneg %p179
        $region26: #{tpu_custom_call.1} parent=11 // pred_check_branch
          %389 = sbr.rel (%p387) target = $region28
        $region27: #{tpu_custom_call.1} parent=11 // pred_region
          _
        $region28: #{tpu_custom_call.1} parent=11 // pred_fallthru
          _
        // Predicated region
        $region29: #{tpu_custom_call.1} parent=11 // pred_check
          %p390 = pneg %p200
        $region30: #{tpu_custom_call.1} parent=11 // pred_check_branch
          %392 = sbr.rel (%p390) target = $region32
        $region31: #{tpu_custom_call.1} parent=11 // pred_region
          %s394 = ssub.s32 512, 512
          %395 = vsyncadd [#allocation9], %s394
          %s396 = sshll.u32 [#allocation10], 4
          %s397 = int_to_ptr.vmem [resolvable:$true] %s396
          %402 = dma.hbm_to_vmem [thread:$0]  %s6, 512, %s397, [#allocation9], 128, 128, 8
        $region32: #{tpu_custom_call.1} parent=11 // pred_fallthru
          _
        // Predicated region
        $region33: #{tpu_custom_call.1} parent=11 // pred_check
          %p403 = pneg %p221
        $region34: #{tpu_custom_call.1} parent=11 // pred_check_branch
          %405 = sbr.rel (%p403) target = $region36
        $region35: #{tpu_custom_call.1} parent=11 // pred_region
          _
        $region36: #{tpu_custom_call.1} parent=11 // pred_fallthru
          _
        // Predicated region
        $region37: #{tpu_custom_call.1} parent=11 // pred_check
          %p406 = pneg %p242
        $region38: #{tpu_custom_call.1} parent=11 // pred_check_branch
          %408 = sbr.rel (%p406) target = $region40
        $region39: #{tpu_custom_call.1} parent=11 // pred_region
          %s410 = ssub.s32 512, 512
          %411 = vsyncadd [#allocation12], %s410
          %s412 = sshll.u32 [#allocation11], 4
          %s413 = int_to_ptr.vmem [resolvable:$true] %s412
          %418 = dma.hbm_to_vmem [thread:$0]  %s8, 512, %s413, [#allocation12], 128, 128, 8
        $region40: #{tpu_custom_call.1} parent=11 // pred_fallthru
          _
        // Predicated region
        $region41: #{tpu_custom_call.1} parent=11 // pred_check
          %p419 = pneg %p263
        $region42: #{tpu_custom_call.1} parent=11 // pred_check_branch
          %421 = sbr.rel (%p419) target = $region44
        $region43: #{tpu_custom_call.1} parent=11 // pred_region
          _
        $region44: #{tpu_custom_call.1} parent=11 // pred_fallthru
          _
        // Predicated region
        $region45: #{tpu_custom_call.1} parent=11 // pred_check
          %p422 = pneg %p315
        $region46: #{tpu_custom_call.1} parent=11 // pred_check_branch
          %424 = sbr.rel (%p422) target = $region48
        $region47: #{tpu_custom_call.1} parent=11 // pred_region
          %p425 = scmp.lt.s32.totalorder %s39, 0
          %s426 = scalar_select %p425, %s39, 0
          %s427 = smul.addr %s426, 8
          %s428 = scalar_lea.vmem %s11, %s427
        $region48: #{tpu_custom_call.1} parent=11 // pred_fallthru
          _
      $region12: #{tpu_custom_call.1} parent=5 // pred_fallthru
        _
      %p429 = scmp.lt.s32.totalorder %s29, 2
      // Predicated region
      $region49: #{tpu_custom_call.1} parent=5 // pred_check
        %p430 = pneg %p429
      $region50: #{tpu_custom_call.1} parent=5 // pred_check_branch
        %432 = sbr.rel (%p430) target = $region52
      $region51: #{tpu_custom_call.1} parent=5 // pred_region
        // Predicated region
        $region53: #{tpu_custom_call.1} parent=51 // pred_check
          %p433 = pneg %p63
        $region54: #{tpu_custom_call.1} parent=51 // pred_check_branch
          %435 = sbr.rel (%p433) target = $region56
        $region55: #{tpu_custom_call.1} parent=51 // pred_region
          %s436 = sand.u32 %s53, 1
          %s437 = scalar_lea.sflag [#allocation3], %s436
          %s438 = sand.u32 %s53, 1
          %s439 = smul.addr %s438, 8
          %s440 = scalar_lea.vmem [#allocation2], %s439
          %s442 = ssub.s32 128, 128
          %443 = vsyncadd %s437, %s442
          %s444 = sadd.s32 %s37, %s36
          %s445 = smul.addr %s444, 128
          %s446 = scalar_lea.hbm %s0, %s445
          %s448 = sshll.u32 %s440, 4
          %s449 = int_to_ptr.vmem [resolvable:$true] %s448
          %451 = dma.hbm_to_vmem [thread:$0]  %s446, 128, %s449, %s437
        $region56: #{tpu_custom_call.1} parent=51 // pred_fallthru
          _
        // Predicated region
        $region57: #{tpu_custom_call.1} parent=51 // pred_check
          %p452 = pneg %p89
        $region58: #{tpu_custom_call.1} parent=51 // pred_check_branch
          %454 = sbr.rel (%p452) target = $region60
        $region59: #{tpu_custom_call.1} parent=51 // pred_region
          %s455 = sand.u32 %s29, 1
          %s456 = scalar_lea.sflag [#allocation6], %s455
          %s457 = sand.u32 %s79, 1
          %s458 = smul.addr %s457, 8
          %s459 = scalar_lea.vmem [#allocation5], %s458
          %s461 = ssub.s32 128, 128
          %462 = vsyncadd %s456, %s461
          %s463 = smul.addr %s36, 128
          %s464 = scalar_lea.hbm %s1, %s463
          %s466 = sshll.u32 %s459, 4
          %s467 = int_to_ptr.vmem [resolvable:$true] %s466
          %469 = dma.hbm_to_vmem [thread:$0]  %s464, 128, %s467, %s456
        $region60: #{tpu_custom_call.1} parent=51 // pred_fallthru
          _
        // Predicated region
        $region61: #{tpu_custom_call.1} parent=51 // pred_check
          %p470 = pneg %p283
        $region62: #{tpu_custom_call.1} parent=51 // pred_check_branch
          %472 = sbr.rel (%p470) target = $region64
        $region63: #{tpu_custom_call.1} parent=51 // pred_region
          %p473 = scmp.lt.s32.totalorder %s36, 1
          %s474 = scalar_select %p473, %s36, 1
          %s475 = scalar_lea.vmem %s10, %s474
        $region64: #{tpu_custom_call.1} parent=51 // pred_fallthru
          _
      $region52: #{tpu_custom_call.1} parent=5 // pred_fallthru
        _
      %p476 = scmp.le.s32.totalorder 1, %s29
      %p477 = scmp.lt.s32.totalorder %s29, 3
      %p478 = pnand %p476, %p477
      %p479 = pneg %p478
      // Predicated region
      $region65: #{tpu_custom_call.1} parent=5 // pred_check
        _
      $region66: #{tpu_custom_call.1} parent=5 // pred_check_branch
        %481 = sbr.rel (%p478) target = $region68
      $region67: #{tpu_custom_call.1} parent=5 // pred_region
        %s482 = ssub.s32 %s29, 1
        %s483 = sand.u32 %s56, 1
        %s484 = scalar_lea.sflag [#allocation3], %s483
        %s485 = sand.u32 %s56, 1
        %s486 = smul.addr %s485, 8
        %s487 = scalar_lea.vmem [#allocation2], %s486
        // Predicated region
        $region69: #{tpu_custom_call.1} parent=67 // pred_check
          %p488 = pneg %p69
        $region70: #{tpu_custom_call.1} parent=67 // pred_check_branch
          %490 = sbr.rel (%p488) target = $region72
        $region71: #{tpu_custom_call.1} parent=67 // pred_region
          %491 = dma.done %s484, 128
        $region72: #{tpu_custom_call.1} parent=67 // pred_fallthru
          _
        %s492 = sand.u32 %s34, 1
        %s493 = scalar_lea.sflag [#allocation6], %s492
        %s494 = sand.u32 %s82, 1
        %s495 = smul.addr %s494, 8
        %s496 = scalar_lea.vmem [#allocation5], %s495
        // Predicated region
        $region73: #{tpu_custom_call.1} parent=67 // pred_check
          %p497 = pneg %p95
        $region74: #{tpu_custom_call.1} parent=67 // pred_check_branch
          %499 = sbr.rel (%p497) target = $region76
        $region75: #{tpu_custom_call.1} parent=67 // pred_region
          %500 = dma.done %s493, 128
        $region76: #{tpu_custom_call.1} parent=67 // pred_fallthru
          _
        // Predicated region
        $region77: #{tpu_custom_call.1} parent=67 // pred_check
          %p501 = pneg %p116
        $region78: #{tpu_custom_call.1} parent=67 // pred_check_branch
          %503 = sbr.rel (%p501) target = $region80
        $region79: #{tpu_custom_call.1} parent=67 // pred_region
          %504 = dma.done [#allocation6], 512
        $region80: #{tpu_custom_call.1} parent=67 // pred_fallthru
          _
        // Predicated region
        $region81: #{tpu_custom_call.1} parent=67 // pred_check
          %p505 = pneg %p158
        $region82: #{tpu_custom_call.1} parent=67 // pred_check_branch
          %507 = sbr.rel (%p505) target = $region84
        $region83: #{tpu_custom_call.1} parent=67 // pred_region
          %508 = dma.done [#allocation9], 512
        $region84: #{tpu_custom_call.1} parent=67 // pred_fallthru
          _
        // Predicated region
        $region85: #{tpu_custom_call.1} parent=67 // pred_check
          %p509 = pneg %p200
        $region86: #{tpu_custom_call.1} parent=67 // pred_check_branch
          %511 = sbr.rel (%p509) target = $region88
        $region87: #{tpu_custom_call.1} parent=67 // pred_region
          %512 = dma.done [#allocation9], 512
        $region88: #{tpu_custom_call.1} parent=67 // pred_fallthru
          _
        // Predicated region
        $region89: #{tpu_custom_call.1} parent=67 // pred_check
          %p513 = pneg %p242
        $region90: #{tpu_custom_call.1} parent=67 // pred_check_branch
          %515 = sbr.rel (%p513) target = $region92
        $region91: #{tpu_custom_call.1} parent=67 // pred_region
          %516 = dma.done [#allocation12], 512
        $region92: #{tpu_custom_call.1} parent=67 // pred_fallthru
          _
        %s517 = sand.u32 %s56, 1
        %s518 = scalar_lea.sflag [#allocation3], %s517
        %s519 = sand.u32 %s56, 1
        %s520 = smul.addr %s519, 8
        %s521 = scalar_lea.vmem [#allocation2], %s520
        %p522 = pneg %p69
        %p523 = pneg %p66
        %s524 = sand.u32 %s34, 1
        %s525 = scalar_lea.sflag [#allocation6], %s524
        %s526 = sand.u32 %s82, 1
        %s527 = smul.addr %s526, 8
        %s528 = scalar_lea.vmem [#allocation5], %s527
        %p529 = pneg %p95
        %p530 = pneg %p92
        %p531 = pneg %p116
        %p532 = pneg %p113
        %p533 = pneg %p137
        %p534 = pneg %p134
        %p535 = pneg %p158
        %p536 = pneg %p155
        %p537 = pneg %p179
        %p538 = pneg %p176
        %p539 = pneg %p200
        %p540 = pneg %p197
        %p541 = pneg %p221
        %p542 = pneg %p218
        %p543 = pneg %p242
        %p544 = pneg %p239
        %p545 = pneg %p263
        %p546 = pneg %p260
        %p547 = scmp.lt.s32.totalorder %s38, 1
        %s548 = scalar_select %p547, %s38, 1
        %s549 = scalar_lea.vmem %s10, %s548
        %p550 = pneg %p289
        %p551 = pneg %p286
        %p552 = scmp.lt.s32.totalorder %s39, 0
        %s553 = scalar_select %p552, %s39, 0
        %s554 = smul.addr %s553, 8
        %s555 = scalar_lea.vmem %s11, %s554
        %p556 = pneg %p315
        %p557 = pneg %p312
        %p558 = pneg %p343
        %p559 = pneg %p340
        %s560 = sand.u32 %s330, 1
        %s561 = scalar_lea.sflag [#allocation4], %s560
        %s562 = sand.u32 %s330, 1
        %s563 = smul.addr %s562, 8
        %s564 = scalar_lea.vmem [#allocation13], %s563
        %p565 = scmp.lt.s32.totalorder %s38, 1
        %s566 = scalar_select %p565, %s38, 1
        %s567 = scalar_lea.vmem %s10, %s566
        %p568 = scmp.lt.s32.totalorder %s39, 0
        %s569 = scalar_select %p568, %s39, 0
        %s570 = smul.addr %s569, 8
        %s571 = scalar_lea.vmem %s11, %s570
        %v572 = vld [vmem:[%s487] sm:$0xff]
        %v573 = vld [vmem:[%s496] sm:$0xff]
        %v574 = vld [vmem:[#allocation7] sm:$0xff]
        %v575 = vld [vmem:[#allocation7 + $0x8] sm:$0xff]
        %v576 = vld [vmem:[#allocation7 + $0x10] sm:$0xff]
        %v577 = vld [vmem:[#allocation7 + $0x18] sm:$0xff]
        %v578 = vld [vmem:[%s3] sm:$0x1]
        %v580 = vlaneseq
        %v581 = vshrl.u32 %v580, 7
        %v582 = vsub.s32 0, %v581
        %v583 = vrot.slane %v578, %v582
        %vm585 = vcmask 261120
        %v587 = vsel %vm585, %v572, 0
        %589 = vmatprep.subr.mxu0 0.0
        %590 = vmatpush1.msra.mxu0 %v574
        %591 = vmatprep.subr.mxu0 0.0
        %592 = vmatpush1.msra.mxu0 %v575
        %593 = vmatprep.subr.mxu0 0.0
        %594 = vmatpush1.msra.mxu0 %v576
        %595 = vmatprep.subr.mxu0 0.0
        %596 = vmatpush1.msra.mxu0 %v577
        %597 = vmatprep.subr.mxu0 0.0
        %598 = vmatpush1.msra.mxu0 0.0
        %599 = vmatprep.subr.mxu0 0.0
        %600 = vmatpush1.msra.mxu0 0.0
        %601 = vmatprep.subr.mxu0 0.0
        %602 = vmatpush1.msra.mxu0 0.0
        %603 = vmatprep.subr.mxu0 0.0
        %604 = vmatpush1.msra.mxu0 0.0
        %605 = vmatprep.subr.mxu0 0.0
        %606 = vmatpush1.msra.mxu0 0.0
        %607 = vmatprep.subr.mxu0 0.0
        %608 = vmatpush1.msra.mxu0 0.0
        %609 = vmatprep.subr.mxu0 0.0
        %610 = vmatpush1.msra.mxu0 0.0
        %611 = vmatprep.subr.mxu0 0.0
        %612 = vmatpush1.msra.mxu0 0.0
        %613 = vmatprep.subr.mxu0 0.0
        %614 = vmatpush1.msra.mxu0 0.0
        %615 = vmatprep.subr.mxu0 0.0
        %616 = vmatpush1.msra.mxu0 0.0
        %617 = vmatprep.subr.mxu0 0.0
        %618 = vmatpush1.msra.mxu0 0.0
        %619 = vmatprep.subr.mxu0 0.0
        %620 = vmatpush1.msra.mxu0 0.0
        %621 = vmatprep.subr.mxu0 0.0
        %622 = vmatpush1.msra.mxu0 0.0
        %623 = vmatprep.subr.mxu0 0.0
        %624 = vmatpush1.msra.mxu0 0.0
        %625 = vmatprep.subr.mxu0 0.0
        %626 = vmatpush1.msra.mxu0 0.0
        %627 = vmatprep.subr.mxu0 0.0
        %628 = vmatpush1.msra.mxu0 0.0
        %629 = vmatprep.subr.mxu0 0.0
        %630 = vmatpush1.msra.mxu0 0.0
        %631 = vmatprep.subr.mxu0 0.0
        %632 = vmatpush1.msra.mxu0 0.0
        %633 = vmatprep.subr.mxu0 0.0
        %634 = vmatpush1.msra.mxu0 0.0
        %635 = vmatprep.subr.mxu0 0.0
        %636 = vmatpush1.msra.mxu0 0.0
        %637 = vmatprep.subr.mxu0 0.0
        %638 = vmatpush1.msra.mxu0 0.0
        %639 = vmatprep.subr.mxu0 0.0
        %640 = vmatpush1.msra.mxu0 0.0
        %641 = vmatprep.subr.mxu0 0.0
        %642 = vmatpush1.msra.mxu0 0.0
        %643 = vmatprep.subr.mxu0 0.0
        %644 = vmatpush1.msra.mxu0 0.0
        %645 = vmatprep.subr.mxu0 0.0
        %646 = vmatpush1.msra.mxu0 0.0
        %647 = vmatprep.subr.mxu0 0.0
        %648 = vmatpush1.msra.mxu0 0.0
        %649 = vmatprep.subr.mxu0 0.0
        %650 = vmatpush1.msra.mxu0 0.0
        %651 = vmatprep.subr.mxu0 0.0
        %652 = vmatpush1.msra.mxu0 0.0
        %653 = vmatprep.mubr.f32.mxu0 0.0
        %654 = vmatmul.mubr.f32.gmra.mrb[0].mxu0 %v587
        %v655 = vpop.f32.mrb[0].mxu0
        %v656 = vadd.f32 %v583, %v655
        %v657 = vpop.f32.mrb[0].mxu0
        %658 = vdwg.mxu0
        %v659 = vld [vmem:[#allocation8] sm:$0xff]
        %v660 = vld [vmem:[#allocation8 + $0x8] sm:$0xff]
        %v661 = vld [vmem:[#allocation8 + $0x10] sm:$0xff]
        %v662 = vld [vmem:[#allocation8 + $0x18] sm:$0xff]
        %v663 = vld [vmem:[%s5] sm:$0x1]
        %v665 = vlaneseq
        %v666 = vshrl.u32 %v665, 7
        %v667 = vsub.s32 0, %v666
        %v668 = vrot.slane %v663, %v667
        %v671 = vsel %vm585, %v573, 0
        %673 = vmatprep.subr.mxu0 0.0
        %674 = vmatpush1.msra.mxu0 %v659
        %675 = vmatprep.subr.mxu0 0.0
        %676 = vmatpush1.msra.mxu0 %v660
        %677 = vmatprep.subr.mxu0 0.0
        %678 = vmatpush1.msra.mxu0 %v661
        %679 = vmatprep.subr.mxu0 0.0
        %680 = vmatpush1.msra.mxu0 %v662
        %681 = vmatprep.subr.mxu0 0.0
        %682 = vmatpush1.msra.mxu0 0.0
        %683 = vmatprep.subr.mxu0 0.0
        %684 = vmatpush1.msra.mxu0 0.0
        %685 = vmatprep.subr.mxu0 0.0
        %686 = vmatpush1.msra.mxu0 0.0
        %687 = vmatprep.subr.mxu0 0.0
        %688 = vmatpush1.msra.mxu0 0.0
        %689 = vmatprep.subr.mxu0 0.0
        %690 = vmatpush1.msra.mxu0 0.0
        %691 = vmatprep.subr.mxu0 0.0
        %692 = vmatpush1.msra.mxu0 0.0
        %693 = vmatprep.subr.mxu0 0.0
        %694 = vmatpush1.msra.mxu0 0.0
        %695 = vmatprep.subr.mxu0 0.0
        %696 = vmatpush1.msra.mxu0 0.0
        %697 = vmatprep.subr.mxu0 0.0
        %698 = vmatpush1.msra.mxu0 0.0
        %699 = vmatprep.subr.mxu0 0.0
        %700 = vmatpush1.msra.mxu0 0.0
        %701 = vmatprep.subr.mxu0 0.0
        %702 = vmatpush1.msra.mxu0 0.0
        %703 = vmatprep.subr.mxu0 0.0
        %704 = vmatpush1.msra.mxu0 0.0
        %705 = vmatprep.subr.mxu0 0.0
        %706 = vmatpush1.msra.mxu0 0.0
        %707 = vmatprep.subr.mxu0 0.0
        %708 = vmatpush1.msra.mxu0 0.0
        %709 = vmatprep.subr.mxu0 0.0
        %710 = vmatpush1.msra.mxu0 0.0
        %711 = vmatprep.subr.mxu0 0.0
        %712 = vmatpush1.msra.mxu0 0.0
        %713 = vmatprep.subr.mxu0 0.0
        %714 = vmatpush1.msra.mxu0 0.0
        %715 = vmatprep.subr.mxu0 0.0
        %716 = vmatpush1.msra.mxu0 0.0
        %717 = vmatprep.subr.mxu0 0.0
        %718 = vmatpush1.msra.mxu0 0.0
        %719 = vmatprep.subr.mxu0 0.0
        %720 = vmatpush1.msra.mxu0 0.0
        %721 = vmatprep.subr.mxu0 0.0
        %722 = vmatpush1.msra.mxu0 0.0
        %723 = vmatprep.subr.mxu0 0.0
        %724 = vmatpush1.msra.mxu0 0.0
        %725 = vmatprep.subr.mxu0 0.0
        %726 = vmatpush1.msra.mxu0 0.0
        %727 = vmatprep.subr.mxu0 0.0
        %728 = vmatpush1.msra.mxu0 0.0
        %729 = vmatprep.subr.mxu0 0.0
        %730 = vmatpush1.msra.mxu0 0.0
        %731 = vmatprep.subr.mxu0 0.0
        %732 = vmatpush1.msra.mxu0 0.0
        %733 = vmatprep.subr.mxu0 0.0
        %734 = vmatpush1.msra.mxu0 0.0
        %735 = vmatprep.subr.mxu0 0.0
        %736 = vmatpush1.msra.mxu0 0.0
        %737 = vmatprep.mubr.f32.mxu0 0.0
        %738 = vmatmul.mubr.f32.gmra.mrb[0].mxu0 %v671
        %v739 = vpop.f32.mrb[0].mxu0
        %v740 = vadd.f32 %v668, %v739
        %v741 = vpop.f32.mrb[0].mxu0
        %742 = vdwg.mxu0
        %v743 = vld [vmem:[#allocation10] sm:$0xff]
        %v744 = vld [vmem:[#allocation10 + $0x8] sm:$0xff]
        %v745 = vld [vmem:[#allocation10 + $0x10] sm:$0xff]
        %v746 = vld [vmem:[#allocation10 + $0x18] sm:$0xff]
        %v747 = vld [vmem:[%s7] sm:$0x1]
        %v749 = vlaneseq
        %v750 = vshrl.u32 %v749, 7
        %v751 = vsub.s32 0, %v750
        %v752 = vrot.slane %v747, %v751
        %754 = vmatprep.subr.mxu0 0.0
        %755 = vmatpush1.msra.mxu0 %v743
        %756 = vmatprep.subr.mxu0 0.0
        %757 = vmatpush1.msra.mxu0 %v744
        %758 = vmatprep.subr.mxu0 0.0
        %759 = vmatpush1.msra.mxu0 %v745
        %760 = vmatprep.subr.mxu0 0.0
        %761 = vmatpush1.msra.mxu0 %v746
        %762 = vmatprep.subr.mxu0 0.0
        %763 = vmatpush1.msra.mxu0 0.0
        %764 = vmatprep.subr.mxu0 0.0
        %765 = vmatpush1.msra.mxu0 0.0
        %766 = vmatprep.subr.mxu0 0.0
        %767 = vmatpush1.msra.mxu0 0.0
        %768 = vmatprep.subr.mxu0 0.0
        %769 = vmatpush1.msra.mxu0 0.0
        %770 = vmatprep.subr.mxu0 0.0
        %771 = vmatpush1.msra.mxu0 0.0
        %772 = vmatprep.subr.mxu0 0.0
        %773 = vmatpush1.msra.mxu0 0.0
        %774 = vmatprep.subr.mxu0 0.0
        %775 = vmatpush1.msra.mxu0 0.0
        %776 = vmatprep.subr.mxu0 0.0
        %777 = vmatpush1.msra.mxu0 0.0
        %778 = vmatprep.subr.mxu0 0.0
        %779 = vmatpush1.msra.mxu0 0.0
        %780 = vmatprep.subr.mxu0 0.0
        %781 = vmatpush1.msra.mxu0 0.0
        %782 = vmatprep.subr.mxu0 0.0
        %783 = vmatpush1.msra.mxu0 0.0
        %784 = vmatprep.subr.mxu0 0.0
        %785 = vmatpush1.msra.mxu0 0.0
        %786 = vmatprep.subr.mxu0 0.0
        %787 = vmatpush1.msra.mxu0 0.0
        %788 = vmatprep.subr.mxu0 0.0
        %789 = vmatpush1.msra.mxu0 0.0
        %790 = vmatprep.subr.mxu0 0.0
        %791 = vmatpush1.msra.mxu0 0.0
        %792 = vmatprep.subr.mxu0 0.0
        %793 = vmatpush1.msra.mxu0 0.0
        %794 = vmatprep.subr.mxu0 0.0
        %795 = vmatpush1.msra.mxu0 0.0
        %796 = vmatprep.subr.mxu0 0.0
        %797 = vmatpush1.msra.mxu0 0.0
        %798 = vmatprep.subr.mxu0 0.0
        %799 = vmatpush1.msra.mxu0 0.0
        %800 = vmatprep.subr.mxu0 0.0
        %801 = vmatpush1.msra.mxu0 0.0
        %802 = vmatprep.subr.mxu0 0.0
        %803 = vmatpush1.msra.mxu0 0.0
        %804 = vmatprep.subr.mxu0 0.0
        %805 = vmatpush1.msra.mxu0 0.0
        %806 = vmatprep.subr.mxu0 0.0
        %807 = vmatpush1.msra.mxu0 0.0
        %808 = vmatprep.subr.mxu0 0.0
        %809 = vmatpush1.msra.mxu0 0.0
        %810 = vmatprep.subr.mxu0 0.0
        %811 = vmatpush1.msra.mxu0 0.0
        %812 = vmatprep.subr.mxu0 0.0
        %813 = vmatpush1.msra.mxu0 0.0
        %814 = vmatprep.subr.mxu0 0.0
        %815 = vmatpush1.msra.mxu0 0.0
        %816 = vmatprep.subr.mxu0 0.0
        %817 = vmatpush1.msra.mxu0 0.0
        %818 = vmatprep.mubr.f32.mxu0 0.0
        %819 = vmatmul.mubr.f32.gmra.mrb[0].mxu0 %v671
        %v820 = vpop.f32.mrb[0].mxu0
        %v821 = vadd.f32 %v752, %v820
        %v822 = vpop.f32.mrb[0].mxu0
        %823 = vdwg.mxu0
        %v824 = vld [vmem:[%s571] sm:$0xff]
        %v825 = vld [vmem:[%s567] sm:$0x1]
        %v827 = vlaneseq
        %v828 = vshrl.u32 %v827, 7
        %v829 = vsub.s32 0, %v828
        %v830 = vrot.slane %v825, %v829
        %v832 = vadd.f32 %v824, %v830
        %v833 = vld [vmem:[#allocation11] sm:$0xff]
        %v834 = vld [vmem:[#allocation11 + $0x8] sm:$0xff]
        %v835 = vld [vmem:[#allocation11 + $0x10] sm:$0xff]
        %v836 = vld [vmem:[#allocation11 + $0x18] sm:$0xff]
        %vm837 = vcmask 64512
        %v839 = vsel %vm837, %v656, 0
        %v842 = vsel %vm837, %v740, 0
        %844 = vmatprep.subr.mxu0 0.0
        %845 = vmatpush1.xpose.msra.mxu0 %v842
        %846 = vmatprep.subr.mxu0 0.0
        %847 = vmatpush1.xpose.msra.mxu0 0.0
        %848 = vmatprep.subr.mxu0 0.0
        %849 = vmatpush1.xpose.msra.mxu0 0.0
        %850 = vmatprep.subr.mxu0 0.0
        %851 = vmatpush1.xpose.msra.mxu0 0.0
        %852 = vmatprep.subr.mxu0 0.0
        %853 = vmatpush1.xpose.msra.mxu0 0.0
        %854 = vmatprep.subr.mxu0 0.0
        %855 = vmatpush1.xpose.msra.mxu0 0.0
        %856 = vmatprep.subr.mxu0 0.0
        %857 = vmatpush1.xpose.msra.mxu0 0.0
        %858 = vmatprep.subr.mxu0 0.0
        %859 = vmatpush1.xpose.msra.mxu0 0.0
        %860 = vmatprep.subr.mxu0 0.0
        %861 = vmatpush1.xpose.msra.mxu0 0.0
        %862 = vmatprep.subr.mxu0 0.0
        %863 = vmatpush1.xpose.msra.mxu0 0.0
        %864 = vmatprep.subr.mxu0 0.0
        %865 = vmatpush1.xpose.msra.mxu0 0.0
        %866 = vmatprep.subr.mxu0 0.0
        %867 = vmatpush1.xpose.msra.mxu0 0.0
        %868 = vmatprep.subr.mxu0 0.0
        %869 = vmatpush1.xpose.msra.mxu0 0.0
        %870 = vmatprep.subr.mxu0 0.0
        %871 = vmatpush1.xpose.msra.mxu0 0.0
        %872 = vmatprep.subr.mxu0 0.0
        %873 = vmatpush1.xpose.msra.mxu0 0.0
        %874 = vmatprep.subr.mxu0 0.0
        %875 = vmatpush1.xpose.msra.mxu0 0.0
        %876 = vmatprep.subr.mxu0 0.0
        %877 = vmatpush1.xpose.msra.mxu0 0.0
        %878 = vmatprep.subr.mxu0 0.0
        %879 = vmatpush1.xpose.msra.mxu0 0.0
        %880 = vmatprep.subr.mxu0 0.0
        %881 = vmatpush1.xpose.msra.mxu0 0.0
        %882 = vmatprep.subr.mxu0 0.0
        %883 = vmatpush1.xpose.msra.mxu0 0.0
        %884 = vmatprep.subr.mxu0 0.0
        %885 = vmatpush1.xpose.msra.mxu0 0.0
        %886 = vmatprep.subr.mxu0 0.0
        %887 = vmatpush1.xpose.msra.mxu0 0.0
        %888 = vmatprep.subr.mxu0 0.0
        %889 = vmatpush1.xpose.msra.mxu0 0.0
        %890 = vmatprep.subr.mxu0 0.0
        %891 = vmatpush1.xpose.msra.mxu0 0.0
        %892 = vmatprep.subr.mxu0 0.0
        %893 = vmatpush1.xpose.msra.mxu0 0.0
        %894 = vmatprep.subr.mxu0 0.0
        %895 = vmatpush1.xpose.msra.mxu0 0.0
        %896 = vmatprep.subr.mxu0 0.0
        %897 = vmatpush1.xpose.msra.mxu0 0.0
        %898 = vmatprep.subr.mxu0 0.0
        %899 = vmatpush1.xpose.msra.mxu0 0.0
        %900 = vmatprep.subr.mxu0 0.0
        %901 = vmatpush1.xpose.msra.mxu0 0.0
        %902 = vmatprep.subr.mxu0 0.0
        %903 = vmatpush1.xpose.msra.mxu0 0.0
        %904 = vmatprep.subr.mxu0 0.0
        %905 = vmatpush1.xpose.msra.mxu0 0.0
        %906 = vmatprep.subr.mxu0 0.0
        %907 = vmatpush1.xpose.msra.mxu0 0.0
        %908 = vmatprep.mubr.f32.mxu0 0.0
        %909 = vmatmul.mubr.f32.gmra.mrb[0].mxu0 %v839
        %v910 = vpop.f32.mrb[0].mxu0
        %v911 = vadd.f32 0.0, %v910
        %v912 = vpop.f32.mrb[0].mxu0
        %913 = vdwg.mxu0
        %v914 = vmul.f32 %v911, 0.17677669
        %v915 = vadd.f32 %v914, %v832
        %v916 = vsel %vm837, %v915, -inf
        %917 = vmax.xlane.f32.xlu0 %v916
        %v918 = vpop.xlane.xlu0 %917
        %v919 = vsub.f32 %v915, %v918
        %v920 = vmul.f32 %v919, 1.442695
        %v921 = vpow.pop %v920
        %v922 = vsel %vm837, %v921, 0.0
        %923 = vadd.xlane.f32.xlu0 %v922
        %v924 = vpop.xlane.xlu0 %923
        %v925 = vrcp.pop %v924
        %v926 = vmul.f32 %v921, %v925
        %v928 = vsel %vm837, %v926, 0
        %930 = vmatprep.subr.mxu0 0.0
        %931 = vmatpush1.msra.mxu0 %v821
        %932 = vmatprep.subr.mxu0 0.0
        %933 = vmatpush1.msra.mxu0 0.0
        %934 = vmatprep.subr.mxu0 0.0
        %935 = vmatpush1.msra.mxu0 0.0
        %936 = vmatprep.subr.mxu0 0.0
        %937 = vmatpush1.msra.mxu0 0.0
        %938 = vmatprep.subr.mxu0 0.0
        %939 = vmatpush1.msra.mxu0 0.0
        %940 = vmatprep.subr.mxu0 0.0
        %941 = vmatpush1.msra.mxu0 0.0
        %942 = vmatprep.subr.mxu0 0.0
        %943 = vmatpush1.msra.mxu0 0.0
        %944 = vmatprep.subr.mxu0 0.0
        %945 = vmatpush1.msra.mxu0 0.0
        %946 = vmatprep.subr.mxu0 0.0
        %947 = vmatpush1.msra.mxu0 0.0
        %948 = vmatprep.subr.mxu0 0.0
        %949 = vmatpush1.msra.mxu0 0.0
        %950 = vmatprep.subr.mxu0 0.0
        %951 = vmatpush1.msra.mxu0 0.0
        %952 = vmatprep.subr.mxu0 0.0
        %953 = vmatpush1.msra.mxu0 0.0
        %954 = vmatprep.subr.mxu0 0.0
        %955 = vmatpush1.msra.mxu0 0.0
        %956 = vmatprep.subr.mxu0 0.0
        %957 = vmatpush1.msra.mxu0 0.0
        %958 = vmatprep.subr.mxu0 0.0
        %959 = vmatpush1.msra.mxu0 0.0
        %960 = vmatprep.subr.mxu0 0.0
        %961 = vmatpush1.msra.mxu0 0.0
        %962 = vmatprep.subr.mxu0 0.0
        %963 = vmatpush1.msra.mxu0 0.0
        %964 = vmatprep.subr.mxu0 0.0
        %965 = vmatpush1.msra.mxu0 0.0
        %966 = vmatprep.subr.mxu0 0.0
        %967 = vmatpush1.msra.mxu0 0.0
        %968 = vmatprep.subr.mxu0 0.0
        %969 = vmatpush1.msra.mxu0 0.0
        %970 = vmatprep.subr.mxu0 0.0
        %971 = vmatpush1.msra.mxu0 0.0
        %972 = vmatprep.subr.mxu0 0.0
        %973 = vmatpush1.msra.mxu0 0.0
        %974 = vmatprep.subr.mxu0 0.0
        %975 = vmatpush1.msra.mxu0 0.0
        %976 = vmatprep.subr.mxu0 0.0
        %977 = vmatpush1.msra.mxu0 0.0
        %978 = vmatprep.subr.mxu0 0.0
        %979 = vmatpush1.msra.mxu0 0.0
        %980 = vmatprep.subr.mxu0 0.0
        %981 = vmatpush1.msra.mxu0 0.0
        %982 = vmatprep.subr.mxu0 0.0
        %983 = vmatpush1.msra.mxu0 0.0
        %984 = vmatprep.subr.mxu0 0.0
        %985 = vmatpush1.msra.mxu0 0.0
        %986 = vmatprep.subr.mxu0 0.0
        %987 = vmatpush1.msra.mxu0 0.0
        %988 = vmatprep.subr.mxu0 0.0
        %989 = vmatpush1.msra.mxu0 0.0
        %990 = vmatprep.subr.mxu0 0.0
        %991 = vmatpush1.msra.mxu0 0.0
        %992 = vmatprep.subr.mxu0 0.0
        %993 = vmatpush1.msra.mxu0 0.0
        %994 = vmatprep.mubr.f32.mxu0 0.0
        %995 = vmatmul.mubr.f32.gmra.mrb[0].mxu0 %v928
        %v996 = vpop.f32.mrb[0].mxu0
        %v997 = vadd.f32 0.0, %v996
        %v998 = vpop.f32.mrb[0].mxu0
        %999 = vdwg.mxu0
        %1000 = vrot.lane.b32.xlu0 %v656, 120
        %v1001 = vpop.permute.xlu0 %1000
        %1002 = vrot.lane.b32.xlu0 %v740, 120
        %v1003 = vpop.permute.xlu0 %1002
        %v1004 = vsel %vm837, %v1001, 0
        %v1006 = vsel %vm837, %v1003, 0
        %1008 = vmatprep.subr.mxu0 0.0
        %1009 = vmatpush1.xpose.msra.mxu0 %v1006
        %1010 = vmatprep.subr.mxu0 0.0
        %1011 = vmatpush1.xpose.msra.mxu0 0.0
        %1012 = vmatprep.subr.mxu0 0.0
        %1013 = vmatpush1.xpose.msra.mxu0 0.0
        %1014 = vmatprep.subr.mxu0 0.0
        %1015 = vmatpush1.xpose.msra.mxu0 0.0
        %1016 = vmatprep.subr.mxu0 0.0
        %1017 = vmatpush1.xpose.msra.mxu0 0.0
        %1018 = vmatprep.subr.mxu0 0.0
        %1019 = vmatpush1.xpose.msra.mxu0 0.0
        %1020 = vmatprep.subr.mxu0 0.0
        %1021 = vmatpush1.xpose.msra.mxu0 0.0
        %1022 = vmatprep.subr.mxu0 0.0
        %1023 = vmatpush1.xpose.msra.mxu0 0.0
        %1024 = vmatprep.subr.mxu0 0.0
        %1025 = vmatpush1.xpose.msra.mxu0 0.0
        %1026 = vmatprep.subr.mxu0 0.0
        %1027 = vmatpush1.xpose.msra.mxu0 0.0
        %1028 = vmatprep.subr.mxu0 0.0
        %1029 = vmatpush1.xpose.msra.mxu0 0.0
        %1030 = vmatprep.subr.mxu0 0.0
        %1031 = vmatpush1.xpose.msra.mxu0 0.0
        %1032 = vmatprep.subr.mxu0 0.0
        %1033 = vmatpush1.xpose.msra.mxu0 0.0
        %1034 = vmatprep.subr.mxu0 0.0
        %1035 = vmatpush1.xpose.msra.mxu0 0.0
        %1036 = vmatprep.subr.mxu0 0.0
        %1037 = vmatpush1.xpose.msra.mxu0 0.0
        %1038 = vmatprep.subr.mxu0 0.0
        %1039 = vmatpush1.xpose.msra.mxu0 0.0
        %1040 = vmatprep.subr.mxu0 0.0
        %1041 = vmatpush1.xpose.msra.mxu0 0.0
        %1042 = vmatprep.subr.mxu0 0.0
        %1043 = vmatpush1.xpose.msra.mxu0 0.0
        %1044 = vmatprep.subr.mxu0 0.0
        %1045 = vmatpush1.xpose.msra.mxu0 0.0
        %1046 = vmatprep.subr.mxu0 0.0
        %1047 = vmatpush1.xpose.msra.mxu0 0.0
        %1048 = vmatprep.subr.mxu0 0.0
        %1049 = vmatpush1.xpose.msra.mxu0 0.0
        %1050 = vmatprep.subr.mxu0 0.0
        %1051 = vmatpush1.xpose.msra.mxu0 0.0
        %1052 = vmatprep.subr.mxu0 0.0
        %1053 = vmatpush1.xpose.msra.mxu0 0.0
        %1054 = vmatprep.subr.mxu0 0.0
        %1055 = vmatpush1.xpose.msra.mxu0 0.0
        %1056 = vmatprep.subr.mxu0 0.0
        %1057 = vmatpush1.xpose.msra.mxu0 0.0
        %1058 = vmatprep.subr.mxu0 0.0
        %1059 = vmatpush1.xpose.msra.mxu0 0.0
        %1060 = vmatprep.subr.mxu0 0.0
        %1061 = vmatpush1.xpose.msra.mxu0 0.0
        %1062 = vmatprep.subr.mxu0 0.0
        %1063 = vmatpush1.xpose.msra.mxu0 0.0
        %1064 = vmatprep.subr.mxu0 0.0
        %1065 = vmatpush1.xpose.msra.mxu0 0.0
        %1066 = vmatprep.subr.mxu0 0.0
        %1067 = vmatpush1.xpose.msra.mxu0 0.0
        %1068 = vmatprep.subr.mxu0 0.0
        %1069 = vmatpush1.xpose.msra.mxu0 0.0
        %1070 = vmatprep.subr.mxu0 0.0
        %1071 = vmatpush1.xpose.msra.mxu0 0.0
        %1072 = vmatprep.mubr.f32.mxu0 0.0
        %1073 = vmatmul.mubr.f32.gmra.mrb[0].mxu0 %v1004
        %v1074 = vpop.f32.mrb[0].mxu0
        %v1075 = vadd.f32 0.0, %v1074
        %v1076 = vpop.f32.mrb[0].mxu0
        %1077 = vdwg.mxu0
        %v1078 = vmul.f32 %v1075, 0.17677669
        %v1079 = vadd.f32 %v1078, %v832
        %v1080 = vsel %vm837, %v1079, -inf
        %1081 = vmax.xlane.f32.xlu0 %v1080
        %v1082 = vpop.xlane.xlu0 %1081
        %v1083 = vsub.f32 %v1079, %v1082
        %v1084 = vmul.f32 %v1083, 1.442695
        %v1085 = vpow.pop %v1084
        %v1086 = vsel %vm837, %v1085, 0.0
        %1087 = vadd.xlane.f32.xlu0 %v1086
        %v1088 = vpop.xlane.xlu0 %1087
        %v1089 = vrcp.pop %v1088
        %v1090 = vmul.f32 %v1085, %v1089
        %1092 = vrot.lane.b32.xlu0 %v821, 120
        %v1093 = vpop.permute.xlu0 %1092
        %v1096 = vsel %vm837, %v1090, 0
        %1098 = vmatprep.subr.mxu0 0.0
        %1099 = vmatpush1.msra.mxu0 %v1093
        %1100 = vmatprep.subr.mxu0 0.0
        %1101 = vmatpush1.msra.mxu0 0.0
        %1102 = vmatprep.subr.mxu0 0.0
        %1103 = vmatpush1.msra.mxu0 0.0
        %1104 = vmatprep.subr.mxu0 0.0
        %1105 = vmatpush1.msra.mxu0 0.0
        %1106 = vmatprep.subr.mxu0 0.0
        %1107 = vmatpush1.msra.mxu0 0.0
        %1108 = vmatprep.subr.mxu0 0.0
        %1109 = vmatpush1.msra.mxu0 0.0
        %1110 = vmatprep.subr.mxu0 0.0
        %1111 = vmatpush1.msra.mxu0 0.0
        %1112 = vmatprep.subr.mxu0 0.0
        %1113 = vmatpush1.msra.mxu0 0.0
        %1114 = vmatprep.subr.mxu0 0.0
        %1115 = vmatpush1.msra.mxu0 0.0
        %1116 = vmatprep.subr.mxu0 0.0
        %1117 = vmatpush1.msra.mxu0 0.0
        %1118 = vmatprep.subr.mxu0 0.0
        %1119 = vmatpush1.msra.mxu0 0.0
        %1120 = vmatprep.subr.mxu0 0.0
        %1121 = vmatpush1.msra.mxu0 0.0
        %1122 = vmatprep.subr.mxu0 0.0
        %1123 = vmatpush1.msra.mxu0 0.0
        %1124 = vmatprep.subr.mxu0 0.0
        %1125 = vmatpush1.msra.mxu0 0.0
        %1126 = vmatprep.subr.mxu0 0.0
        %1127 = vmatpush1.msra.mxu0 0.0
        %1128 = vmatprep.subr.mxu0 0.0
        %1129 = vmatpush1.msra.mxu0 0.0
        %1130 = vmatprep.subr.mxu0 0.0
        %1131 = vmatpush1.msra.mxu0 0.0
        %1132 = vmatprep.subr.mxu0 0.0
        %1133 = vmatpush1.msra.mxu0 0.0
        %1134 = vmatprep.subr.mxu0 0.0
        %1135 = vmatpush1.msra.mxu0 0.0
        %1136 = vmatprep.subr.mxu0 0.0
        %1137 = vmatpush1.msra.mxu0 0.0
        %1138 = vmatprep.subr.mxu0 0.0
        %1139 = vmatpush1.msra.mxu0 0.0
        %1140 = vmatprep.subr.mxu0 0.0
        %1141 = vmatpush1.msra.mxu0 0.0
        %1142 = vmatprep.subr.mxu0 0.0
        %1143 = vmatpush1.msra.mxu0 0.0
        %1144 = vmatprep.subr.mxu0 0.0
        %1145 = vmatpush1.msra.mxu0 0.0
        %1146 = vmatprep.subr.mxu0 0.0
        %1147 = vmatpush1.msra.mxu0 0.0
        %1148 = vmatprep.subr.mxu0 0.0
        %1149 = vmatpush1.msra.mxu0 0.0
        %1150 = vmatprep.subr.mxu0 0.0
        %1151 = vmatpush1.msra.mxu0 0.0
        %1152 = vmatprep.subr.mxu0 0.0
        %1153 = vmatpush1.msra.mxu0 0.0
        %1154 = vmatprep.subr.mxu0 0.0
        %1155 = vmatpush1.msra.mxu0 0.0
        %1156 = vmatprep.subr.mxu0 0.0
        %1157 = vmatpush1.msra.mxu0 0.0
        %1158 = vmatprep.subr.mxu0 0.0
        %1159 = vmatpush1.msra.mxu0 0.0
        %1160 = vmatprep.subr.mxu0 0.0
        %1161 = vmatpush1.msra.mxu0 0.0
        %1162 = vmatprep.mubr.f32.mxu0 0.0
        %1163 = vmatmul.mubr.f32.gmra.mrb[0].mxu0 %v1096
        %v1164 = vpop.f32.mrb[0].mxu0
        %v1165 = vadd.f32 0.0, %v1164
        %v1166 = vpop.f32.mrb[0].mxu0
        %1167 = vdwg.mxu0
        %v1169 = vsel %vm837, %v1165, 0
        %1171 = vmatprep.subr.mxu0 0.0
        %1172 = vmatpush1.msra.mxu0 %v834
        %1173 = vmatprep.subr.mxu0 0.0
        %1174 = vmatpush1.msra.mxu0 0.0
        %1175 = vmatprep.subr.mxu0 0.0
        %1176 = vmatpush1.msra.mxu0 0.0
        %1177 = vmatprep.subr.mxu0 0.0
        %1178 = vmatpush1.msra.mxu0 0.0
        %1179 = vmatprep.subr.mxu0 0.0
        %1180 = vmatpush1.msra.mxu0 0.0
        %1181 = vmatprep.subr.mxu0 0.0
        %1182 = vmatpush1.msra.mxu0 0.0
        %1183 = vmatprep.subr.mxu0 0.0
        %1184 = vmatpush1.msra.mxu0 0.0
        %1185 = vmatprep.subr.mxu0 0.0
        %1186 = vmatpush1.msra.mxu0 0.0
        %1187 = vmatprep.subr.mxu0 0.0
        %1188 = vmatpush1.msra.mxu0 0.0
        %1189 = vmatprep.subr.mxu0 0.0
        %1190 = vmatpush1.msra.mxu0 0.0
        %1191 = vmatprep.subr.mxu0 0.0
        %1192 = vmatpush1.msra.mxu0 0.0
        %1193 = vmatprep.subr.mxu0 0.0
        %1194 = vmatpush1.msra.mxu0 0.0
        %1195 = vmatprep.subr.mxu0 0.0
        %1196 = vmatpush1.msra.mxu0 0.0
        %1197 = vmatprep.subr.mxu0 0.0
        %1198 = vmatpush1.msra.mxu0 0.0
        %1199 = vmatprep.subr.mxu0 0.0
        %1200 = vmatpush1.msra.mxu0 0.0
        %1201 = vmatprep.subr.mxu0 0.0
        %1202 = vmatpush1.msra.mxu0 0.0
        %1203 = vmatprep.subr.mxu0 0.0
        %1204 = vmatpush1.msra.mxu0 0.0
        %1205 = vmatprep.subr.mxu0 0.0
        %1206 = vmatpush1.msra.mxu0 0.0
        %1207 = vmatprep.subr.mxu0 0.0
        %1208 = vmatpush1.msra.mxu0 0.0
        %1209 = vmatprep.subr.mxu0 0.0
        %1210 = vmatpush1.msra.mxu0 0.0
        %1211 = vmatprep.subr.mxu0 0.0
        %1212 = vmatpush1.msra.mxu0 0.0
        %1213 = vmatprep.subr.mxu0 0.0
        %1214 = vmatpush1.msra.mxu0 0.0
        %1215 = vmatprep.subr.mxu0 0.0
        %1216 = vmatpush1.msra.mxu0 0.0
        %1217 = vmatprep.subr.mxu0 0.0
        %1218 = vmatpush1.msra.mxu0 0.0
        %1219 = vmatprep.subr.mxu0 0.0
        %1220 = vmatpush1.msra.mxu0 0.0
        %1221 = vmatprep.subr.mxu0 0.0
        %1222 = vmatpush1.msra.mxu0 0.0
        %1223 = vmatprep.subr.mxu0 0.0
        %1224 = vmatpush1.msra.mxu0 0.0
        %1225 = vmatprep.subr.mxu0 0.0
        %1226 = vmatpush1.msra.mxu0 0.0
        %1227 = vmatprep.subr.mxu0 0.0
        %1228 = vmatpush1.msra.mxu0 0.0
        %1229 = vmatprep.subr.mxu0 0.0
        %1230 = vmatpush1.msra.mxu0 0.0
        %1231 = vmatprep.subr.mxu0 0.0
        %1232 = vmatpush1.msra.mxu0 0.0
        %1233 = vmatprep.subr.mxu0 0.0
        %1234 = vmatpush1.msra.mxu0 0.0
        %1235 = vmatprep.mubr.f32.mxu0 0.0
        %1236 = vmatmul.mubr.f32.gmra.mrb[0].mxu0 %v1169
        %v1237 = vpop.f32.mrb[0].mxu0
        %v1238 = vadd.f32 0.0, %v1237
        %v1239 = vpop.f32.mrb[0].mxu0
        %1240 = vdwg.mxu0
        %v1242 = vsel %vm837, %v997, 0
        %1244 = vmatprep.subr.mxu0 0.0
        %1245 = vmatpush1.msra.mxu0 %v833
        %1246 = vmatprep.subr.mxu0 0.0
        %1247 = vmatpush1.msra.mxu0 0.0
        %1248 = vmatprep.subr.mxu0 0.0
        %1249 = vmatpush1.msra.mxu0 0.0
        %1250 = vmatprep.subr.mxu0 0.0
        %1251 = vmatpush1.msra.mxu0 0.0
        %1252 = vmatprep.subr.mxu0 0.0
        %1253 = vmatpush1.msra.mxu0 0.0
        %1254 = vmatprep.subr.mxu0 0.0
        %1255 = vmatpush1.msra.mxu0 0.0
        %1256 = vmatprep.subr.mxu0 0.0
        %1257 = vmatpush1.msra.mxu0 0.0
        %1258 = vmatprep.subr.mxu0 0.0
        %1259 = vmatpush1.msra.mxu0 0.0
        %1260 = vmatprep.subr.mxu0 0.0
        %1261 = vmatpush1.msra.mxu0 0.0
        %1262 = vmatprep.subr.mxu0 0.0
        %1263 = vmatpush1.msra.mxu0 0.0
        %1264 = vmatprep.subr.mxu0 0.0
        %1265 = vmatpush1.msra.mxu0 0.0
        %1266 = vmatprep.subr.mxu0 0.0
        %1267 = vmatpush1.msra.mxu0 0.0
        %1268 = vmatprep.subr.mxu0 0.0
        %1269 = vmatpush1.msra.mxu0 0.0
        %1270 = vmatprep.subr.mxu0 0.0
        %1271 = vmatpush1.msra.mxu0 0.0
        %1272 = vmatprep.subr.mxu0 0.0
        %1273 = vmatpush1.msra.mxu0 0.0
        %1274 = vmatprep.subr.mxu0 0.0
        %1275 = vmatpush1.msra.mxu0 0.0
        %1276 = vmatprep.subr.mxu0 0.0
        %1277 = vmatpush1.msra.mxu0 0.0
        %1278 = vmatprep.subr.mxu0 0.0
        %1279 = vmatpush1.msra.mxu0 0.0
        %1280 = vmatprep.subr.mxu0 0.0
        %1281 = vmatpush1.msra.mxu0 0.0
        %1282 = vmatprep.subr.mxu0 0.0
        %1283 = vmatpush1.msra.mxu0 0.0
        %1284 = vmatprep.subr.mxu0 0.0
        %1285 = vmatpush1.msra.mxu0 0.0
        %1286 = vmatprep.subr.mxu0 0.0
        %1287 = vmatpush1.msra.mxu0 0.0
        %1288 = vmatprep.subr.mxu0 0.0
        %1289 = vmatpush1.msra.mxu0 0.0
        %1290 = vmatprep.subr.mxu0 0.0
        %1291 = vmatpush1.msra.mxu0 0.0
        %1292 = vmatprep.subr.mxu0 0.0
        %1293 = vmatpush1.msra.mxu0 0.0
        %1294 = vmatprep.subr.mxu0 0.0
        %1295 = vmatpush1.msra.mxu0 0.0
        %1296 = vmatprep.subr.mxu0 0.0
        %1297 = vmatpush1.msra.mxu0 0.0
        %1298 = vmatprep.subr.mxu0 0.0
        %1299 = vmatpush1.msra.mxu0 0.0
        %1300 = vmatprep.subr.mxu0 0.0
        %1301 = vmatpush1.msra.mxu0 0.0
        %1302 = vmatprep.subr.mxu0 0.0
        %1303 = vmatpush1.msra.mxu0 0.0
        %1304 = vmatprep.subr.mxu0 0.0
        %1305 = vmatpush1.msra.mxu0 0.0
        %1306 = vmatprep.subr.mxu0 0.0
        %1307 = vmatpush1.msra.mxu0 0.0
        %1308 = vmatprep.mubr.f32.mxu0 0.0
        %1309 = vmatmul.mubr.f32.gmra.mrb[0].mxu0 %v1242
        %v1310 = vpop.f32.mrb[0].mxu0
        %v1311 = vadd.f32 %v1238, %v1310
        %v1312 = vpop.f32.mrb[0].mxu0
        %1313 = vdwg.mxu0
        %1314 = vrot.lane.b32.xlu0 %v656, 112
        %v1315 = vpop.permute.xlu0 %1314
        %1316 = vrot.lane.b32.xlu0 %v740, 112
        %v1317 = vpop.permute.xlu0 %1316
        %v1318 = vsel %vm837, %v1315, 0
        %v1320 = vsel %vm837, %v1317, 0
        %1322 = vmatprep.subr.mxu0 0.0
        %1323 = vmatpush1.xpose.msra.mxu0 %v1320
        %1324 = vmatprep.subr.mxu0 0.0
        %1325 = vmatpush1.xpose.msra.mxu0 0.0
        %1326 = vmatprep.subr.mxu0 0.0
        %1327 = vmatpush1.xpose.msra.mxu0 0.0
        %1328 = vmatprep.subr.mxu0 0.0
        %1329 = vmatpush1.xpose.msra.mxu0 0.0
        %1330 = vmatprep.subr.mxu0 0.0
        %1331 = vmatpush1.xpose.msra.mxu0 0.0
        %1332 = vmatprep.subr.mxu0 0.0
        %1333 = vmatpush1.xpose.msra.mxu0 0.0
        %1334 = vmatprep.subr.mxu0 0.0
        %1335 = vmatpush1.xpose.msra.mxu0 0.0
        %1336 = vmatprep.subr.mxu0 0.0
        %1337 = vmatpush1.xpose.msra.mxu0 0.0
        %1338 = vmatprep.subr.mxu0 0.0
        %1339 = vmatpush1.xpose.msra.mxu0 0.0
        %1340 = vmatprep.subr.mxu0 0.0
        %1341 = vmatpush1.xpose.msra.mxu0 0.0
        %1342 = vmatprep.subr.mxu0 0.0
        %1343 = vmatpush1.xpose.msra.mxu0 0.0
        %1344 = vmatprep.subr.mxu0 0.0
        %1345 = vmatpush1.xpose.msra.mxu0 0.0
        %1346 = vmatprep.subr.mxu0 0.0
        %1347 = vmatpush1.xpose.msra.mxu0 0.0
        %1348 = vmatprep.subr.mxu0 0.0
        %1349 = vmatpush1.xpose.msra.mxu0 0.0
        %1350 = vmatprep.subr.mxu0 0.0
        %1351 = vmatpush1.xpose.msra.mxu0 0.0
        %1352 = vmatprep.subr.mxu0 0.0
        %1353 = vmatpush1.xpose.msra.mxu0 0.0
        %1354 = vmatprep.subr.mxu0 0.0
        %1355 = vmatpush1.xpose.msra.mxu0 0.0
        %1356 = vmatprep.subr.mxu0 0.0
        %1357 = vmatpush1.xpose.msra.mxu0 0.0
        %1358 = vmatprep.subr.mxu0 0.0
        %1359 = vmatpush1.xpose.msra.mxu0 0.0
        %1360 = vmatprep.subr.mxu0 0.0
        %1361 = vmatpush1.xpose.msra.mxu0 0.0
        %1362 = vmatprep.subr.mxu0 0.0
        %1363 = vmatpush1.xpose.msra.mxu0 0.0
        %1364 = vmatprep.subr.mxu0 0.0
        %1365 = vmatpush1.xpose.msra.mxu0 0.0
        %1366 = vmatprep.subr.mxu0 0.0
        %1367 = vmatpush1.xpose.msra.mxu0 0.0
        %1368 = vmatprep.subr.mxu0 0.0
        %1369 = vmatpush1.xpose.msra.mxu0 0.0
        %1370 = vmatprep.subr.mxu0 0.0
        %1371 = vmatpush1.xpose.msra.mxu0 0.0
        %1372 = vmatprep.subr.mxu0 0.0
        %1373 = vmatpush1.xpose.msra.mxu0 0.0
        %1374 = vmatprep.subr.mxu0 0.0
        %1375 = vmatpush1.xpose.msra.mxu0 0.0
        %1376 = vmatprep.subr.mxu0 0.0
        %1377 = vmatpush1.xpose.msra.mxu0 0.0
        %1378 = vmatprep.subr.mxu0 0.0
        %1379 = vmatpush1.xpose.msra.mxu0 0.0
        %1380 = vmatprep.subr.mxu0 0.0
        %1381 = vmatpush1.xpose.msra.mxu0 0.0
        %1382 = vmatprep.subr.mxu0 0.0
        %1383 = vmatpush1.xpose.msra.mxu0 0.0
        %1384 = vmatprep.subr.mxu0 0.0
        %1385 = vmatpush1.xpose.msra.mxu0 0.0
        %1386 = vmatprep.mubr.f32.mxu0 0.0
        %1387 = vmatmul.mubr.f32.gmra.mrb[0].mxu0 %v1318
        %v1388 = vpop.f32.mrb[0].mxu0
        %v1389 = vadd.f32 0.0, %v1388
        %v1390 = vpop.f32.mrb[0].mxu0
        %1391 = vdwg.mxu0
        %v1392 = vmul.f32 %v1389, 0.17677669
        %v1393 = vadd.f32 %v1392, %v832
        %v1394 = vsel %vm837, %v1393, -inf
        %1395 = vmax.xlane.f32.xlu0 %v1394
        %v1396 = vpop.xlane.xlu0 %1395
        %v1397 = vsub.f32 %v1393, %v1396
        %v1398 = vmul.f32 %v1397, 1.442695
        %v1399 = vpow.pop %v1398
        %v1400 = vsel %vm837, %v1399, 0.0
        %1401 = vadd.xlane.f32.xlu0 %v1400
        %v1402 = vpop.xlane.xlu0 %1401
        %v1403 = vrcp.pop %v1402
        %v1404 = vmul.f32 %v1399, %v1403
        %1405 = vrot.lane.b32.xlu0 %v821, 112
        %v1406 = vpop.permute.xlu0 %1405
        %v1409 = vsel %vm837, %v1404, 0
        %1411 = vmatprep.subr.mxu0 0.0
        %1412 = vmatpush1.msra.mxu0 %v1406
        %1413 = vmatprep.subr.mxu0 0.0
        %1414 = vmatpush1.msra.mxu0 0.0
        %1415 = vmatprep.subr.mxu0 0.0
        %1416 = vmatpush1.msra.mxu0 0.0
        %1417 = vmatprep.subr.mxu0 0.0
        %1418 = vmatpush1.msra.mxu0 0.0
        %1419 = vmatprep.subr.mxu0 0.0
        %1420 = vmatpush1.msra.mxu0 0.0
        %1421 = vmatprep.subr.mxu0 0.0
        %1422 = vmatpush1.msra.mxu0 0.0
        %1423 = vmatprep.subr.mxu0 0.0
        %1424 = vmatpush1.msra.mxu0 0.0
        %1425 = vmatprep.subr.mxu0 0.0
        %1426 = vmatpush1.msra.mxu0 0.0
        %1427 = vmatprep.subr.mxu0 0.0
        %1428 = vmatpush1.msra.mxu0 0.0
        %1429 = vmatprep.subr.mxu0 0.0
        %1430 = vmatpush1.msra.mxu0 0.0
        %1431 = vmatprep.subr.mxu0 0.0
        %1432 = vmatpush1.msra.mxu0 0.0
        %1433 = vmatprep.subr.mxu0 0.0
        %1434 = vmatpush1.msra.mxu0 0.0
        %1435 = vmatprep.subr.mxu0 0.0
        %1436 = vmatpush1.msra.mxu0 0.0
        %1437 = vmatprep.subr.mxu0 0.0
        %1438 = vmatpush1.msra.mxu0 0.0
        %1439 = vmatprep.subr.mxu0 0.0
        %1440 = vmatpush1.msra.mxu0 0.0
        %1441 = vmatprep.subr.mxu0 0.0
        %1442 = vmatpush1.msra.mxu0 0.0
        %1443 = vmatprep.subr.mxu0 0.0
        %1444 = vmatpush1.msra.mxu0 0.0
        %1445 = vmatprep.subr.mxu0 0.0
        %1446 = vmatpush1.msra.mxu0 0.0
        %1447 = vmatprep.subr.mxu0 0.0
        %1448 = vmatpush1.msra.mxu0 0.0
        %1449 = vmatprep.subr.mxu0 0.0
        %1450 = vmatpush1.msra.mxu0 0.0
        %1451 = vmatprep.subr.mxu0 0.0
        %1452 = vmatpush1.msra.mxu0 0.0
        %1453 = vmatprep.subr.mxu0 0.0
        %1454 = vmatpush1.msra.mxu0 0.0
        %1455 = vmatprep.subr.mxu0 0.0
        %1456 = vmatpush1.msra.mxu0 0.0
        %1457 = vmatprep.subr.mxu0 0.0
        %1458 = vmatpush1.msra.mxu0 0.0
        %1459 = vmatprep.subr.mxu0 0.0
        %1460 = vmatpush1.msra.mxu0 0.0
        %1461 = vmatprep.subr.mxu0 0.0
        %1462 = vmatpush1.msra.mxu0 0.0
        %1463 = vmatprep.subr.mxu0 0.0
        %1464 = vmatpush1.msra.mxu0 0.0
        %1465 = vmatprep.subr.mxu0 0.0
        %1466 = vmatpush1.msra.mxu0 0.0
        %1467 = vmatprep.subr.mxu0 0.0
        %1468 = vmatpush1.msra.mxu0 0.0
        %1469 = vmatprep.subr.mxu0 0.0
        %1470 = vmatpush1.msra.mxu0 0.0
        %1471 = vmatprep.subr.mxu0 0.0
        %1472 = vmatpush1.msra.mxu0 0.0
        %1473 = vmatprep.subr.mxu0 0.0
        %1474 = vmatpush1.msra.mxu0 0.0
        %1475 = vmatprep.mubr.f32.mxu0 0.0
        %1476 = vmatmul.mubr.f32.gmra.mrb[0].mxu0 %v1409
        %v1477 = vpop.f32.mrb[0].mxu0
        %v1478 = vadd.f32 0.0, %v1477
        %v1479 = vpop.f32.mrb[0].mxu0
        %1480 = vdwg.mxu0
        %v1482 = vsel %vm837, %v1478, 0
        %1484 = vmatprep.subr.mxu0 0.0
        %1485 = vmatpush1.msra.mxu0 %v835
        %1486 = vmatprep.subr.mxu0 0.0
        %1487 = vmatpush1.msra.mxu0 0.0
        %1488 = vmatprep.subr.mxu0 0.0
        %1489 = vmatpush1.msra.mxu0 0.0
        %1490 = vmatprep.subr.mxu0 0.0
        %1491 = vmatpush1.msra.mxu0 0.0
        %1492 = vmatprep.subr.mxu0 0.0
        %1493 = vmatpush1.msra.mxu0 0.0
        %1494 = vmatprep.subr.mxu0 0.0
        %1495 = vmatpush1.msra.mxu0 0.0
        %1496 = vmatprep.subr.mxu0 0.0
        %1497 = vmatpush1.msra.mxu0 0.0
        %1498 = vmatprep.subr.mxu0 0.0
        %1499 = vmatpush1.msra.mxu0 0.0
        %1500 = vmatprep.subr.mxu0 0.0
        %1501 = vmatpush1.msra.mxu0 0.0
        %1502 = vmatprep.subr.mxu0 0.0
        %1503 = vmatpush1.msra.mxu0 0.0
        %1504 = vmatprep.subr.mxu0 0.0
        %1505 = vmatpush1.msra.mxu0 0.0
        %1506 = vmatprep.subr.mxu0 0.0
        %1507 = vmatpush1.msra.mxu0 0.0
        %1508 = vmatprep.subr.mxu0 0.0
        %1509 = vmatpush1.msra.mxu0 0.0
        %1510 = vmatprep.subr.mxu0 0.0
        %1511 = vmatpush1.msra.mxu0 0.0
        %1512 = vmatprep.subr.mxu0 0.0
        %1513 = vmatpush1.msra.mxu0 0.0
        %1514 = vmatprep.subr.mxu0 0.0
        %1515 = vmatpush1.msra.mxu0 0.0
        %1516 = vmatprep.subr.mxu0 0.0
        %1517 = vmatpush1.msra.mxu0 0.0
        %1518 = vmatprep.subr.mxu0 0.0
        %1519 = vmatpush1.msra.mxu0 0.0
        %1520 = vmatprep.subr.mxu0 0.0
        %1521 = vmatpush1.msra.mxu0 0.0
        %1522 = vmatprep.subr.mxu0 0.0
        %1523 = vmatpush1.msra.mxu0 0.0
        %1524 = vmatprep.subr.mxu0 0.0
        %1525 = vmatpush1.msra.mxu0 0.0
        %1526 = vmatprep.subr.mxu0 0.0
        %1527 = vmatpush1.msra.mxu0 0.0
        %1528 = vmatprep.subr.mxu0 0.0
        %1529 = vmatpush1.msra.mxu0 0.0
        %1530 = vmatprep.subr.mxu0 0.0
        %1531 = vmatpush1.msra.mxu0 0.0
        %1532 = vmatprep.subr.mxu0 0.0
        %1533 = vmatpush1.msra.mxu0 0.0
        %1534 = vmatprep.subr.mxu0 0.0
        %1535 = vmatpush1.msra.mxu0 0.0
        %1536 = vmatprep.subr.mxu0 0.0
        %1537 = vmatpush1.msra.mxu0 0.0
        %1538 = vmatprep.subr.mxu0 0.0
        %1539 = vmatpush1.msra.mxu0 0.0
        %1540 = vmatprep.subr.mxu0 0.0
        %1541 = vmatpush1.msra.mxu0 0.0
        %1542 = vmatprep.subr.mxu0 0.0
        %1543 = vmatpush1.msra.mxu0 0.0
        %1544 = vmatprep.subr.mxu0 0.0
        %1545 = vmatpush1.msra.mxu0 0.0
        %1546 = vmatprep.subr.mxu0 0.0
        %1547 = vmatpush1.msra.mxu0 0.0
        %1548 = vmatprep.mubr.f32.mxu0 0.0
        %1549 = vmatmul.mubr.f32.gmra.mrb[0].mxu0 %v1482
        %v1550 = vpop.f32.mrb[0].mxu0
        %v1551 = vadd.f32 0.0, %v1550
        %v1552 = vpop.f32.mrb[0].mxu0
        %1553 = vdwg.mxu0
        %v1554 = vadd.f32 %v1311, %v1551
        %1555 = vrot.lane.b32.xlu0 %v656, 104
        %v1556 = vpop.permute.xlu0 %1555
        %1557 = vrot.lane.b32.xlu0 %v740, 104
        %v1558 = vpop.permute.xlu0 %1557
        %v1559 = vsel %vm837, %v1556, 0
        %v1561 = vsel %vm837, %v1558, 0
        %1563 = vmatprep.subr.mxu0 0.0
        %1564 = vmatpush1.xpose.msra.mxu0 %v1561
        %1565 = vmatprep.subr.mxu0 0.0
        %1566 = vmatpush1.xpose.msra.mxu0 0.0
        %1567 = vmatprep.subr.mxu0 0.0
        %1568 = vmatpush1.xpose.msra.mxu0 0.0
        %1569 = vmatprep.subr.mxu0 0.0
        %1570 = vmatpush1.xpose.msra.mxu0 0.0
        %1571 = vmatprep.subr.mxu0 0.0
        %1572 = vmatpush1.xpose.msra.mxu0 0.0
        %1573 = vmatprep.subr.mxu0 0.0
        %1574 = vmatpush1.xpose.msra.mxu0 0.0
        %1575 = vmatprep.subr.mxu0 0.0
        %1576 = vmatpush1.xpose.msra.mxu0 0.0
        %1577 = vmatprep.subr.mxu0 0.0
        %1578 = vmatpush1.xpose.msra.mxu0 0.0
        %1579 = vmatprep.subr.mxu0 0.0
        %1580 = vmatpush1.xpose.msra.mxu0 0.0
        %1581 = vmatprep.subr.mxu0 0.0
        %1582 = vmatpush1.xpose.msra.mxu0 0.0
        %1583 = vmatprep.subr.mxu0 0.0
        %1584 = vmatpush1.xpose.msra.mxu0 0.0
        %1585 = vmatprep.subr.mxu0 0.0
        %1586 = vmatpush1.xpose.msra.mxu0 0.0
        %1587 = vmatprep.subr.mxu0 0.0
        %1588 = vmatpush1.xpose.msra.mxu0 0.0
        %1589 = vmatprep.subr.mxu0 0.0
        %1590 = vmatpush1.xpose.msra.mxu0 0.0
        %1591 = vmatprep.subr.mxu0 0.0
        %1592 = vmatpush1.xpose.msra.mxu0 0.0
        %1593 = vmatprep.subr.mxu0 0.0
        %1594 = vmatpush1.xpose.msra.mxu0 0.0
        %1595 = vmatprep.subr.mxu0 0.0
        %1596 = vmatpush1.xpose.msra.mxu0 0.0
        %1597 = vmatprep.subr.mxu0 0.0
        %1598 = vmatpush1.xpose.msra.mxu0 0.0
        %1599 = vmatprep.subr.mxu0 0.0
        %1600 = vmatpush1.xpose.msra.mxu0 0.0
        %1601 = vmatprep.subr.mxu0 0.0
        %1602 = vmatpush1.xpose.msra.mxu0 0.0
        %1603 = vmatprep.subr.mxu0 0.0
        %1604 = vmatpush1.xpose.msra.mxu0 0.0
        %1605 = vmatprep.subr.mxu0 0.0
        %1606 = vmatpush1.xpose.msra.mxu0 0.0
        %1607 = vmatprep.subr.mxu0 0.0
        %1608 = vmatpush1.xpose.msra.mxu0 0.0
        %1609 = vmatprep.subr.mxu0 0.0
        %1610 = vmatpush1.xpose.msra.mxu0 0.0
        %1611 = vmatprep.subr.mxu0 0.0
        %1612 = vmatpush1.xpose.msra.mxu0 0.0
        %1613 = vmatprep.subr.mxu0 0.0
        %1614 = vmatpush1.xpose.msra.mxu0 0.0
        %1615 = vmatprep.subr.mxu0 0.0
        %1616 = vmatpush1.xpose.msra.mxu0 0.0
        %1617 = vmatprep.subr.mxu0 0.0
        %1618 = vmatpush1.xpose.msra.mxu0 0.0
        %1619 = vmatprep.subr.mxu0 0.0
        %1620 = vmatpush1.xpose.msra.mxu0 0.0
        %1621 = vmatprep.subr.mxu0 0.0
        %1622 = vmatpush1.xpose.msra.mxu0 0.0
        %1623 = vmatprep.subr.mxu0 0.0
        %1624 = vmatpush1.xpose.msra.mxu0 0.0
        %1625 = vmatprep.subr.mxu0 0.0
        %1626 = vmatpush1.xpose.msra.mxu0 0.0
        %1627 = vmatprep.mubr.f32.mxu0 0.0
        %1628 = vmatmul.mubr.f32.gmra.mrb[0].mxu0 %v1559
        %v1629 = vpop.f32.mrb[0].mxu0
        %v1630 = vadd.f32 0.0, %v1629
        %v1631 = vpop.f32.mrb[0].mxu0
        %1632 = vdwg.mxu0
        %v1633 = vmul.f32 %v1630, 0.17677669
        %v1634 = vadd.f32 %v1633, %v832
        %v1635 = vsel %vm837, %v1634, -inf
        %1636 = vmax.xlane.f32.xlu0 %v1635
        %v1637 = vpop.xlane.xlu0 %1636
        %v1638 = vsub.f32 %v1634, %v1637
        %v1639 = vmul.f32 %v1638, 1.442695
        %v1640 = vpow.pop %v1639
        %v1641 = vsel %vm837, %v1640, 0.0
        %1642 = vadd.xlane.f32.xlu0 %v1641
        %v1643 = vpop.xlane.xlu0 %1642
        %v1644 = vrcp.pop %v1643
        %v1645 = vmul.f32 %v1640, %v1644
        %1646 = vrot.lane.b32.xlu0 %v821, 104
        %v1647 = vpop.permute.xlu0 %1646
        %v1650 = vsel %vm837, %v1645, 0
        %1652 = vmatprep.subr.mxu0 0.0
        %1653 = vmatpush1.msra.mxu0 %v1647
        %1654 = vmatprep.subr.mxu0 0.0
        %1655 = vmatpush1.msra.mxu0 0.0
        %1656 = vmatprep.subr.mxu0 0.0
        %1657 = vmatpush1.msra.mxu0 0.0
        %1658 = vmatprep.subr.mxu0 0.0
        %1659 = vmatpush1.msra.mxu0 0.0
        %1660 = vmatprep.subr.mxu0 0.0
        %1661 = vmatpush1.msra.mxu0 0.0
        %1662 = vmatprep.subr.mxu0 0.0
        %1663 = vmatpush1.msra.mxu0 0.0
        %1664 = vmatprep.subr.mxu0 0.0
        %1665 = vmatpush1.msra.mxu0 0.0
        %1666 = vmatprep.subr.mxu0 0.0
        %1667 = vmatpush1.msra.mxu0 0.0
        %1668 = vmatprep.subr.mxu0 0.0
        %1669 = vmatpush1.msra.mxu0 0.0
        %1670 = vmatprep.subr.mxu0 0.0
        %1671 = vmatpush1.msra.mxu0 0.0
        %1672 = vmatprep.subr.mxu0 0.0
        %1673 = vmatpush1.msra.mxu0 0.0
        %1674 = vmatprep.subr.mxu0 0.0
        %1675 = vmatpush1.msra.mxu0 0.0
        %1676 = vmatprep.subr.mxu0 0.0
        %1677 = vmatpush1.msra.mxu0 0.0
        %1678 = vmatprep.subr.mxu0 0.0
        %1679 = vmatpush1.msra.mxu0 0.0
        %1680 = vmatprep.subr.mxu0 0.0
        %1681 = vmatpush1.msra.mxu0 0.0
        %1682 = vmatprep.subr.mxu0 0.0
        %1683 = vmatpush1.msra.mxu0 0.0
        %1684 = vmatprep.subr.mxu0 0.0
        %1685 = vmatpush1.msra.mxu0 0.0
        %1686 = vmatprep.subr.mxu0 0.0
        %1687 = vmatpush1.msra.mxu0 0.0
        %1688 = vmatprep.subr.mxu0 0.0
        %1689 = vmatpush1.msra.mxu0 0.0
        %1690 = vmatprep.subr.mxu0 0.0
        %1691 = vmatpush1.msra.mxu0 0.0
        %1692 = vmatprep.subr.mxu0 0.0
        %1693 = vmatpush1.msra.mxu0 0.0
        %1694 = vmatprep.subr.mxu0 0.0
        %1695 = vmatpush1.msra.mxu0 0.0
        %1696 = vmatprep.subr.mxu0 0.0
        %1697 = vmatpush1.msra.mxu0 0.0
        %1698 = vmatprep.subr.mxu0 0.0
        %1699 = vmatpush1.msra.mxu0 0.0
        %1700 = vmatprep.subr.mxu0 0.0
        %1701 = vmatpush1.msra.mxu0 0.0
        %1702 = vmatprep.subr.mxu0 0.0
        %1703 = vmatpush1.msra.mxu0 0.0
        %1704 = vmatprep.subr.mxu0 0.0
        %1705 = vmatpush1.msra.mxu0 0.0
        %1706 = vmatprep.subr.mxu0 0.0
        %1707 = vmatpush1.msra.mxu0 0.0
        %1708 = vmatprep.subr.mxu0 0.0
        %1709 = vmatpush1.msra.mxu0 0.0
        %1710 = vmatprep.subr.mxu0 0.0
        %1711 = vmatpush1.msra.mxu0 0.0
        %1712 = vmatprep.subr.mxu0 0.0
        %1713 = vmatpush1.msra.mxu0 0.0
        %1714 = vmatprep.subr.mxu0 0.0
        %1715 = vmatpush1.msra.mxu0 0.0
        %1716 = vmatprep.mubr.f32.mxu0 0.0
        %1717 = vmatmul.mubr.f32.gmra.mrb[0].mxu0 %v1650
        %v1718 = vpop.f32.mrb[0].mxu0
        %v1719 = vadd.f32 0.0, %v1718
        %v1720 = vpop.f32.mrb[0].mxu0
        %1721 = vdwg.mxu0
        %v1723 = vsel %vm837, %v1719, 0
        %1725 = vmatprep.subr.mxu0 0.0
        %1726 = vmatpush1.msra.mxu0 %v836
        %1727 = vmatprep.subr.mxu0 0.0
        %1728 = vmatpush1.msra.mxu0 0.0
        %1729 = vmatprep.subr.mxu0 0.0
        %1730 = vmatpush1.msra.mxu0 0.0
        %1731 = vmatprep.subr.mxu0 0.0
        %1732 = vmatpush1.msra.mxu0 0.0
        %1733 = vmatprep.subr.mxu0 0.0
        %1734 = vmatpush1.msra.mxu0 0.0
        %1735 = vmatprep.subr.mxu0 0.0
        %1736 = vmatpush1.msra.mxu0 0.0
        %1737 = vmatprep.subr.mxu0 0.0
        %1738 = vmatpush1.msra.mxu0 0.0
        %1739 = vmatprep.subr.mxu0 0.0
        %1740 = vmatpush1.msra.mxu0 0.0
        %1741 = vmatprep.subr.mxu0 0.0
        %1742 = vmatpush1.msra.mxu0 0.0
        %1743 = vmatprep.subr.mxu0 0.0
        %1744 = vmatpush1.msra.mxu0 0.0
        %1745 = vmatprep.subr.mxu0 0.0
        %1746 = vmatpush1.msra.mxu0 0.0
        %1747 = vmatprep.subr.mxu0 0.0
        %1748 = vmatpush1.msra.mxu0 0.0
        %1749 = vmatprep.subr.mxu0 0.0
        %1750 = vmatpush1.msra.mxu0 0.0
        %1751 = vmatprep.subr.mxu0 0.0
        %1752 = vmatpush1.msra.mxu0 0.0
        %1753 = vmatprep.subr.mxu0 0.0
        %1754 = vmatpush1.msra.mxu0 0.0
        %1755 = vmatprep.subr.mxu0 0.0
        %1756 = vmatpush1.msra.mxu0 0.0
        %1757 = vmatprep.subr.mxu0 0.0
        %1758 = vmatpush1.msra.mxu0 0.0
        %1759 = vmatprep.subr.mxu0 0.0
        %1760 = vmatpush1.msra.mxu0 0.0
        %1761 = vmatprep.subr.mxu0 0.0
        %1762 = vmatpush1.msra.mxu0 0.0
        %1763 = vmatprep.subr.mxu0 0.0
        %1764 = vmatpush1.msra.mxu0 0.0
        %1765 = vmatprep.subr.mxu0 0.0
        %1766 = vmatpush1.msra.mxu0 0.0
        %1767 = vmatprep.subr.mxu0 0.0
        %1768 = vmatpush1.msra.mxu0 0.0
        %1769 = vmatprep.subr.mxu0 0.0
        %1770 = vmatpush1.msra.mxu0 0.0
        %1771 = vmatprep.subr.mxu0 0.0
        %1772 = vmatpush1.msra.mxu0 0.0
        %1773 = vmatprep.subr.mxu0 0.0
        %1774 = vmatpush1.msra.mxu0 0.0
        %1775 = vmatprep.subr.mxu0 0.0
        %1776 = vmatpush1.msra.mxu0 0.0
        %1777 = vmatprep.subr.mxu0 0.0
        %1778 = vmatpush1.msra.mxu0 0.0
        %1779 = vmatprep.subr.mxu0 0.0
        %1780 = vmatpush1.msra.mxu0 0.0
        %1781 = vmatprep.subr.mxu0 0.0
        %1782 = vmatpush1.msra.mxu0 0.0
        %1783 = vmatprep.subr.mxu0 0.0
        %1784 = vmatpush1.msra.mxu0 0.0
        %1785 = vmatprep.subr.mxu0 0.0
        %1786 = vmatpush1.msra.mxu0 0.0
        %1787 = vmatprep.subr.mxu0 0.0
        %1788 = vmatpush1.msra.mxu0 0.0
        %1789 = vmatprep.mubr.f32.mxu0 0.0
        %1790 = vmatmul.mubr.f32.gmra.mrb[0].mxu0 %v1723
        %v1791 = vpop.f32.mrb[0].mxu0
        %v1792 = vadd.f32 0.0, %v1791
        %v1793 = vpop.f32.mrb[0].mxu0
        %1794 = vdwg.mxu0
        %v1795 = vadd.f32 %v1554, %v1792
        %v1796 = vld [vmem:[%s9] sm:$0x1]
        %v1798 = vlaneseq
        %v1799 = vshrl.u32 %v1798, 7
        %v1800 = vsub.s32 0, %v1799
        %v1801 = vrot.slane %v1796, %v1800
        %v1803 = vadd.f32 %v1795, %v1801
        %1804 = vst.msk [vmem:[%s564] sm:$0xff] %vm585, %v1803
        %s1805 = sand.u32 %s330, 1
        %s1806 = scalar_lea.sflag [#allocation4], %s1805
        %s1807 = sand.u32 %s330, 1
        %s1808 = smul.addr %s1807, 8
        %s1809 = scalar_lea.vmem [#allocation13], %s1808
        // Predicated region
        $region93: #{tpu_custom_call.1} parent=67 // pred_check
          %p1810 = pneg %p340
        $region94: #{tpu_custom_call.1} parent=67 // pred_check_branch
          %1812 = sbr.rel (%p1810) target = $region96
        $region95: #{tpu_custom_call.1} parent=67 // pred_region
          %s1814 = ssub.s32 128, 128
          %1815 = vsyncadd %s1806, %s1814
          %s1816 = sadd.s32 %s39, %s38
          %s1817 = smul.addr %s1816, 128
          %s1818 = scalar_lea.hbm %s12, %s1817
          %s1820 = sshll.u32 %s1809, 4
          %s1821 = int_to_ptr.vmem [resolvable:$true] %s1820
          %1823 = dma.vmem_to_hbm [thread:$0]  %s1821, 128, %s1818, %s1806
        $region96: #{tpu_custom_call.1} parent=67 // pred_fallthru
          _
      $region68: #{tpu_custom_call.1} parent=5 // pred_fallthru
        _
      %p1824 = scmp.le.s32.totalorder 2, %s29
      // Predicated region
      $region97: #{tpu_custom_call.1} parent=5 // pred_check
        %p1825 = pneg %p1824
      $region98: #{tpu_custom_call.1} parent=5 // pred_check_branch
        %1827 = sbr.rel (%p1825) target = $region100
      $region99: #{tpu_custom_call.1} parent=5 // pred_region
        %s1828 = ssub.s32 %s29, 2
        // Predicated region
        $region101: #{tpu_custom_call.1} parent=99 // pred_check
          %p1829 = pneg %p346
        $region102: #{tpu_custom_call.1} parent=99 // pred_check_branch
          %1831 = sbr.rel (%p1829) target = $region104
        $region103: #{tpu_custom_call.1} parent=99 // pred_region
          %s1832 = sand.u32 %s331, 1
          %s1833 = scalar_lea.sflag [#allocation4], %s1832
          %s1834 = sand.u32 %s331, 1
          %s1835 = smul.addr %s1834, 8
          %s1836 = scalar_lea.vmem [#allocation13], %s1835
          %1837 = dma.done %s1833, 128
        $region104: #{tpu_custom_call.1} parent=99 // pred_fallthru
          _
      $region100: #{tpu_custom_call.1} parent=5 // pred_fallthru
        _
    $region6: #{tpu_custom_call.1} parent=1 // loop_footer
      %s33 = sadd.s32 1, %s29
    $region7: #{tpu_custom_call.1} parent=1 // loop_footer_branch
      %28 = sbr.rel target = $region3
    $region8: #{tpu_custom_call.1} parent=1 // loop_exit
      _
    %1838 = vsyncpa [#allocation3], 1
    %s1839 = scalar_lea.sflag [#allocation3], 1
    %1840 = vsyncpa %s1839, 1
    %1841 = vsyncpa [#allocation6], 1
    %s1842 = scalar_lea.sflag [#allocation6], 1
    %1843 = vsyncpa %s1842, 1
    %1844 = vsyncpa [#allocation9], 1
    %1845 = vsyncpa [#allocation12], 1
    %1846 = vsyncpa [#allocation4], 1
    %s1847 = scalar_lea.sflag [#allocation4], 1
    %1848 = vsyncpa %s1847, 1

</llo_original>
